<compile_context>
chip_gen: v7x
topology: tpu7x:2x2x1
jax: 0.10.0
libtpu: 0.0.40
codegen_flags: <defaults>
</compile_context>

<pallas_src>
import jax
import jax.numpy as jnp
import numpy as np
from jax.experimental import pallas as pl
from jax.experimental.pallas import tpu as pltpu

# ----------------------- small, consistent config -----------------------
B = 2            # batch
C_IN = 4         # n_genomic_features
L = 32           # sequence_length
F = 32           # n_filters          (300 in the original)
K1 = 5           # first_kernel_size  (19 in the original)
NB = 2           # n_residual_blocks  (5 in the original)
H_FC = 32        # fc1 hidden units   (1000 in the original)
N_OUT = 16       # n_outputs          (919 in the original)
L1 = L - K1 + 1  # conv1 output length (valid conv) = 28
EPS = 1e-5

# ---- padded / tile-aligned dims (lane = 128, sublane = 8) ----
LANE = 128
FP = LANE                      # padded n_filters
HP = LANE                      # padded fc1 hidden
NP = LANE                      # padded n_outputs
KCP = LANE                     # padded K1*C_IN im2col depth (20 -> 128)
L1P = ((L1 + 7) // 8) * 8      # padded per-batch segment length = 32
ROWS = B * L1P                 # batch stacked along sublanes = 64
BP = max(8, ((B + 7) // 8) * 8)  # padded batch rows for the output store = 8

# TODO(synk): the PyTorch __init__ declares fc1 with in_features =
# n_filters * conv_output_size, but forward() feeds it the globally
# max-pooled tensor of size n_filters; fc1 here matches the actual forward.

# ---- packed-parameter index constants (shared by wrapper & kernel) ----
W_CONV1 = 0
W_FC1 = 1
W_FC2 = 2
def W_RESA(nb): return 3 + 6 * nb          # 3 taps: +0,+1,+2
def W_RESB(nb): return 3 + 6 * nb + 3      # 3 taps: +0,+1,+2
NW = 3 + 6 * NB                            # 128x128 weight slabs

VEC_S1 = 0
VEC_T1 = 1
def VEC_SA(nb): return 2 + nb
def VEC_TA(nb): return 2 + NB + nb
def VEC_SB(nb): return 2 + 2 * NB + nb
def VEC_TB(nb): return 2 + 3 * NB + nb
VEC_FC1B = 2 + 4 * NB
VEC_FC2B = 3 + 4 * NB
NVEC = 4 + 4 * NB                          # [NVEC, 128] vector slabs


# ------------------------------- the kernel --------------------------------
def chromdragonn_kernel(xcol_ref, w_ref, vec_ref, out_ref):
    # valid-row mask: within each padded segment of L1P rows, first L1 are real
    row = jax.lax.broadcasted_iota(jnp.int32, (ROWS, FP), 0)
    valid = (row % L1P) < L1                                   # [ROWS, FP]

    def vec(i):                                                # -> [1, 128]
        return vec_ref[pl.ds(i, 1), :]

    # ---- conv1 (valid, k=K1) as one im2col matmul + folded BN + ReLU ----
    h = jnp.dot(xcol_ref[...], w_ref[W_CONV1],
                preferred_element_type=jnp.float32)            # [ROWS, FP]
    h = jnp.maximum(h * vec(VEC_S1) + vec(VEC_T1), 0.0)
    # keep pad rows at exact zero -> rolls see correct zero padding
    h = jnp.where(valid, h, 0.0)

    def conv3(u, base):
        # "same" conv1d (k=3, pad=1) as three accumulating 128x128 MXU dots.
        # Pad rows of `u` are zero, so cyclic rolls reproduce the zero padding
        # at every batch-segment boundary (no per-tap masks needed).
        um1 = pltpu.roll(u, shift=1, axis=0)                   # u[t-1]
        up1 = pltpu.roll(u, shift=ROWS - 1, axis=0)            # u[t+1]
        acc = jnp.dot(um1, w_ref[base + 0], preferred_element_type=jnp.float32)
        acc = acc + jnp.dot(u, w_ref[base + 1], preferred_element_type=jnp.float32)
        acc = acc + jnp.dot(up1, w_ref[base + 2], preferred_element_type=jnp.float32)
        return acc

    # ---- residual blocks (static unroll) ----
    for nb in range(NB):
        h1 = jnp.maximum(
            conv3(h, W_RESA(nb)) * vec(VEC_SA(nb)) + vec(VEC_TA(nb)), 0.0)
        h1 = jnp.where(valid, h1, 0.0)
        h2 = conv3(h1, W_RESB(nb)) * vec(VEC_SB(nb)) + vec(VEC_TB(nb))
        h = jnp.maximum(h2 + h, 0.0)
        h = jnp.where(valid, h, 0.0)

    # ---- global max pool per batch segment (robust -inf fill on pad rows) ----
    neg = jnp.finfo(jnp.float32).min
    pooled = jnp.max(jnp.where(valid, h, neg).reshape(B, L1P, FP), axis=1)  # [B, FP]
    if BP > B:
        pooled = jnp.concatenate(
            [pooled, jnp.zeros((BP - B, FP), jnp.float32)], axis=0)        # [BP, FP]

    # ---- fc1 + ReLU, fc2, sigmoid (dropout = identity at inference) ----
    z1 = jnp.maximum(
        jnp.dot(pooled, w_ref[W_FC1], preferred_element_type=jnp.float32)
        + vec(VEC_FC1B), 0.0)                                  # [BP, HP]
    z2 = (jnp.dot(z1, w_ref[W_FC2], preferred_element_type=jnp.float32)
          + vec(VEC_FC2B))                                     # [BP, NP]
    out_ref[...] = jax.nn.sigmoid(z2)                          # (8, 128) dense store


# ------------------------------ the wrapper ---------------------------------
def _full_spec(shape):
    nd = len(shape)
    return pl.BlockSpec(shape, lambda i, _nd=nd: (0,) * _nd)


def _pad2(a, rows, cols):
    return jnp.pad(a, ((0, rows - a.shape[0]), (0, cols - a.shape[1])))


def pack_params(params):
    """Zero-pad every parameter to 128-lane slabs and pack into two refs."""
    (w1, s1, t1, wA, sA, tA, wB, sB, tB, fc1w, fc1b, fc2w, fc2b) = params

    w_list = [None] * NW
    w_list[W_CONV1] = _pad2(w1.reshape(K1 * C_IN, F), KCP, FP)
    w_list[W_FC1] = _pad2(fc1w, FP, HP)
    w_list[W_FC2] = _pad2(fc2w, HP, NP)
    for nb in range(NB):
        for k in range(3):
            w_list[W_RESA(nb) + k] = _pad2(wA[nb, k], FP, FP)
            w_list[W_RESB(nb) + k] = _pad2(wB[nb, k], FP, FP)
    W = jnp.stack(w_list)                                      # [NW, 128, 128]

    vec_list = [None] * NVEC
    vec_list[VEC_S1] = _pad2(s1, 1, LANE)
    vec_list[VEC_T1] = _pad2(t1, 1, LANE)
    for nb in range(NB):
        vec_list[VEC_SA(nb)] = _pad2(sA[nb], 1, LANE)
        vec_list[VEC_TA(nb)] = _pad2(tA[nb], 1, LANE)
        vec_list[VEC_SB(nb)] = _pad2(sB[nb], 1, LANE)
        vec_list[VEC_TB(nb)] = _pad2(tB[nb], 1, LANE)
    vec_list[VEC_FC1B] = _pad2(fc1b, 1, LANE)
    vec_list[VEC_FC2B] = _pad2(fc2b, 1, LANE)
    VEC = jnp.concatenate(vec_list, axis=0)                    # [NVEC, 128]
    return W, VEC


def chromdragonn_forward(x_blc, params):
    W, VEC = pack_params(params)

    # im2col of the input (layout plumbing, no compute), segment- and
    # lane-padded so every row/column lands on an (8,128) tile boundary.
    taps = [x_blc[:, k:k + L1, :] for k in range(K1)]          # each [B, L1, C_IN]
    x_col = jnp.concatenate(taps, axis=-1)                     # [B, L1, K1*C_IN]
    x_col = jnp.pad(x_col, ((0, 0), (0, L1P - L1), (0, KCP - K1 * C_IN)))
    x_col = x_col.reshape(ROWS, KCP)                           # [64, 128]

    flops = (2 * ROWS * KCP * FP                               # conv1
             + NB * 2 * 3 * 2 * ROWS * FP * FP                 # residual convs
             + 2 * BP * FP * HP + 2 * BP * HP * NP)            # fc1, fc2
    bytes_accessed = 4 * (x_col.size + W.size + VEC.size + BP * NP)

    out = pl.pallas_call(
        chromdragonn_kernel,
        out_shape=jax.ShapeDtypeStruct((BP, NP), jnp.float32),
        grid_spec=pltpu.PrefetchScalarGridSpec(
            num_scalar_prefetch=0,
            grid=(1,),                         # toy shapes: whole problem fits VMEM
            in_specs=[
                _full_spec((ROWS, KCP)),       # im2col input
                _full_spec((NW, LANE, LANE)),  # packed 128x128 weight slabs
                _full_spec((NVEC, LANE)),      # packed BN scale/shift + fc biases
            ],
            out_specs=_full_spec((BP, NP)),
        ),
        compiler_params=pltpu.CompilerParams(
            dimension_semantics=("arbitrary",)),
        cost_estimate=pl.CostEstimate(
            flops=flops, transcendentals=BP * NP,
            bytes_accessed=bytes_accessed),
    )(x_col, W, VEC)
    return out[:B, :N_OUT]                                     # slice off padding


# ------------------------ deterministic parameter init ----------------------
def init_params(key):
    ks = iter(jax.random.split(key, 32))

    def nrm(shape, scale=0.1):
        return scale * jax.random.normal(next(ks), shape, jnp.float32)

    def pos(shape):
        return jax.random.uniform(next(ks), shape, jnp.float32, minval=0.5, maxval=1.5)

    def fold_bn(gamma, beta, mean, var, conv_bias):
        # eval-mode BN folded into per-channel scale/shift applied after the
        # bias-free conv:  y = conv*s + t  with s = g/sqrt(v+eps),
        # t = beta + s*(bias - mean)
        s = gamma / jnp.sqrt(var + EPS)
        t = beta + s * (conv_bias - mean)
        return s[None, :], t[None, :]

    w1 = nrm((K1, C_IN, F))                    # [k, in, out]
    b1 = nrm((F,))
    s1, t1 = fold_bn(pos((F,)), nrm((F,)), nrm((F,)), pos((F,)), b1)

    wA = nrm((NB, 3, F, F))
    bA = nrm((NB, F))
    wB = nrm((NB, 3, F, F))
    bB = nrm((NB, F))
    sA, tA, sB, tB = [], [], [], []
    for nb in range(NB):
        s, t = fold_bn(pos((F,)), nrm((F,)), nrm((F,)), pos((F,)), bA[nb])
        sA.append(s); tA.append(t)
        s, t = fold_bn(pos((F,)), nrm((F,)), nrm((F,)), pos((F,)), bB[nb])
        sB.append(s); tB.append(t)
    sA, tA = jnp.stack(sA), jnp.stack(tA)      # [NB, 1, F]
    sB, tB = jnp.stack(sB), jnp.stack(tB)

    fc1w = nrm((F, H_FC))
    fc1b = nrm((1, H_FC))
    fc2w = nrm((H_FC, N_OUT))
    fc2b = nrm((1, N_OUT))
    return (w1, s1, t1, wA, sA, tA, wB, sB, tB, fc1w, fc1b, fc2w, fc2b)


# ----------------------- pure-JAX reference (for check) ---------------------
def _conv_valid(x_blc, w_kio):
    K = w_kio.shape[0]
    Lout = x_blc.shape[1] - K + 1
    out = jnp.zeros((x_blc.shape[0], Lout, w_kio.shape[2]), jnp.float32)
    for k in range(K):
        out = out + jnp.einsum('blc,cf->blf', x_blc[:, k:k + Lout, :], w_kio[k])
    return out


def _conv_same3(h, w):
    hp = jnp.pad(h, ((0, 0), (1, 1), (0, 0)))
    return _conv_valid(hp, w)


def ref_forward(x_blc, params):
    (w1, s1, t1, wA, sA, tA, wB, sB, tB, fc1w, fc1b, fc2w, fc2b) = params
    h = jax.nn.relu(_conv_valid(x_blc, w1) * s1[None] + t1[None])
    for nb in range(NB):
        h1 = jax.nn.relu(_conv_same3(h, wA[nb]) * sA[nb][None] + tA[nb][None])
        h2 = _conv_same3(h1, wB[nb]) * sB[nb][None] + tB[nb][None]
        h = jax.nn.relu(h2 + h)
    m = jnp.max(h, axis=1)                     # global max pool -> [B, F]
    z1 = jax.nn.relu(m @ fc1w + fc1b)
    z2 = z1 @ fc2w + fc2b
    return jax.nn.sigmoid(z2)


# ---------------------------------- main -------------------------------------
if __name__ == "__main__":
    key = jax.random.PRNGKey(0)
    kx, kp = jax.random.split(key)

    # PyTorch-convention input: [batch, n_genomic_features, sequence_length]
    x_ncl = jax.random.normal(kx, (B, C_IN, L), jnp.float32)
    params = init_params(kp)

    x_blc = jnp.transpose(x_ncl, (0, 2, 1))    # -> NLC for the kernel

    out = chromdragonn_forward(x_blc, params)
    out = jax.block_until_ready(out)
    assert out.shape == (B, N_OUT)

    ref = ref_forward(x_blc, params)
    np.testing.assert_allclose(np.asarray(out), np.asarray(ref),
                               rtol=1e-4, atol=1e-4)
    print("KERNEL_OK")
</pallas_src>

<mosaic_0001>
module attributes {stable_mosaic.version = 11 : i64} {
  func.func @chromdragonn_kernel(%arg0: i32, %arg1: memref<64x128xf32, #tpu.memory_space<vmem>>, %arg2: memref<15x128x128xf32, #tpu.memory_space<vmem>>, %arg3: memref<12x128xf32, #tpu.memory_space<vmem>>, %arg4: memref<8x128xf32, #tpu.memory_space<vmem>>) attributes {dimension_semantics = [#tpu.dimension_semantics<arbitrary>], iteration_bounds = array<i64: 1>, scalar_prefetch = 0 : i64, scratch_operands = 0 : i64, tpu.core_type = #tpu.core_type<tc>, window_params = [{pipeline_mode = #tpu.pipeline_mode<synchronous>, transform_indices = @transform_0, window_bounds = array<i64: 64, 128>}, {pipeline_mode = #tpu.pipeline_mode<synchronous>, transform_indices = @transform_1, window_bounds = array<i64: 15, 128, 128>}, {pipeline_mode = #tpu.pipeline_mode<synchronous>, transform_indices = @transform_2, window_bounds = array<i64: 12, 128>}, {pipeline_mode = #tpu.pipeline_mode<synchronous>, transform_indices = @transform_3, window_bounds = array<i64: 8, 128>}]} {
    %0 = tpu.iota {dimensions = array<i32: 0>} : vector<64x128xi32>
    %c32_i32 = arith.constant 32 : i32
    %c0_i32 = arith.constant 0 : i32
    %1 = arith.cmpi eq, %c32_i32, %c0_i32 : i32
    %c1_i32 = arith.constant 1 : i32
    %2 = arith.select %1, %c1_i32, %c32_i32 : i32
    %3 = vector.broadcast %2 : i32 to vector<64x128xi32>
    %4 = arith.remsi %0, %3 : vector<64x128xi32>
    %c0_i32_0 = arith.constant 0 : i32
    %5 = vector.broadcast %c0_i32_0 : i32 to vector<64x128xi32>
    %6 = arith.cmpi ne, %4, %5 : vector<64x128xi32>
    %c0_i32_1 = arith.constant 0 : i32
    %7 = vector.broadcast %c0_i32_1 : i32 to vector<64x128xi32>
    %8 = arith.cmpi slt, %4, %7 : vector<64x128xi32>
    %c0_i32_2 = arith.constant 0 : i32
    %9 = arith.cmpi slt, %2, %c0_i32_2 : i32
    %10 = vector.broadcast %9 : i1 to vector<64x128xi1>
    %11 = vector.broadcast %10 : vector<64x128xi1> to vector<64x128xi1>
    %12 = arith.xori %8, %11 : vector<64x128xi1>
    %13 = arith.andi %12, %6 : vector<64x128xi1>
    %14 = vector.broadcast %2 : i32 to vector<64x128xi32>
    %15 = arith.addi %4, %14 : vector<64x128xi32>
    %16 = arith.select %13, %15, %4 : vector<64x128xi1>, vector<64x128xi32>
    %c28_i32 = arith.constant 28 : i32
    %17 = vector.broadcast %c28_i32 : i32 to vector<64x128xi32>
    %18 = arith.cmpi slt, %16, %17 : vector<64x128xi32>
    %c0 = arith.constant 0 : index
    %c0_3 = arith.constant 0 : index
    %19 = vector.load %arg1[%c0, %c0_3] : memref<64x128xf32, #tpu.memory_space<vmem>>, vector<64x128xf32>
    %c0_4 = arith.constant 0 : index
    %c0_5 = arith.constant 0 : index
    %c0_6 = arith.constant 0 : index
    %20 = vector.load %arg2[%c0_4, %c0_5, %c0_6] : memref<15x128x128xf32, #tpu.memory_space<vmem>>, vector<1x128x128xf32>
    %21 = vector.shape_cast %20 : vector<1x128x128xf32> to vector<128x128xf32>
    %cst = arith.constant dense<0.000000e+00> : vector<64x128xf32>
    %22 = tpu.matmul %19, %21, %cst {dimension_numbers = #tpu.dot_dimension_numbers<[1], [0], [0], [1], [0, 0, 1, 1], [], []>} : vector<64x128xf32>, vector<128x128xf32>, vector<64x128xf32> -> vector<64x128xf32>
    %c0_7 = arith.constant 0 : index
    %c0_8 = arith.constant 0 : index
    %23 = vector.load %arg3[%c0_7, %c0_8] : memref<12x128xf32, #tpu.memory_space<vmem>>, vector<1x128xf32>
    %24 = vector.broadcast %23 : vector<1x128xf32> to vector<64x128xf32>
    %25 = arith.mulf %22, %24 : vector<64x128xf32>
    %c1 = arith.constant 1 : index
    %c0_9 = arith.constant 0 : index
    %26 = vector.load %arg3[%c1, %c0_9] : memref<12x128xf32, #tpu.memory_space<vmem>>, vector<1x128xf32>
    %27 = vector.broadcast %26 : vector<1x128xf32> to vector<64x128xf32>
    %28 = arith.addf %25, %27 : vector<64x128xf32>
    %cst_10 = arith.constant 0.000000e+00 : f32
    %29 = vector.broadcast %cst_10 : f32 to vector<64x128xf32>
    %30 = arith.maximumf %28, %29 : vector<64x128xf32>
    %cst_11 = arith.constant 0.000000e+00 : f32
    %31 = vector.broadcast %cst_11 : f32 to vector<64x128xf32>
    %32 = arith.select %18, %30, %31 : vector<64x128xi1>, vector<64x128xf32>
    %c1_i32_12 = arith.constant 1 : i32
    %33 = tpu.dynamic_rotate %32 by %c1_i32_12 dim 0 : vector<64x128xf32>, i32 -> vector<64x128xf32>
    %c63_i32 = arith.constant 63 : i32
    %34 = tpu.dynamic_rotate %32 by %c63_i32 dim 0 : vector<64x128xf32>, i32 -> vector<64x128xf32>
    %c3 = arith.constant 3 : index
    %c0_13 = arith.constant 0 : index
    %c0_14 = arith.constant 0 : index
    %35 = vector.load %arg2[%c3, %c0_13, %c0_14] : memref<15x128x128xf32, #tpu.memory_space<vmem>>, vector<1x128x128xf32>
    %36 = vector.shape_cast %35 : vector<1x128x128xf32> to vector<128x128xf32>
    %cst_15 = arith.constant dense<0.000000e+00> : vector<64x128xf32>
    %37 = tpu.matmul %33, %36, %cst_15 {dimension_numbers = #tpu.dot_dimension_numbers<[1], [0], [0], [1], [0, 0, 1, 1], [], []>} : vector<64x128xf32>, vector<128x128xf32>, vector<64x128xf32> -> vector<64x128xf32>
    %c4 = arith.constant 4 : index
    %c0_16 = arith.constant 0 : index
    %c0_17 = arith.constant 0 : index
    %38 = vector.load %arg2[%c4, %c0_16, %c0_17] : memref<15x128x128xf32, #tpu.memory_space<vmem>>, vector<1x128x128xf32>
    %39 = vector.shape_cast %38 : vector<1x128x128xf32> to vector<128x128xf32>
    %cst_18 = arith.constant dense<0.000000e+00> : vector<64x128xf32>
    %40 = tpu.matmul %32, %39, %cst_18 {dimension_numbers = #tpu.dot_dimension_numbers<[1], [0], [0], [1], [0, 0, 1, 1], [], []>} : vector<64x128xf32>, vector<128x128xf32>, vector<64x128xf32> -> vector<64x128xf32>
    %41 = arith.addf %37, %40 : vector<64x128xf32>
    %c5 = arith.constant 5 : index
    %c0_19 = arith.constant 0 : index
    %c0_20 = arith.constant 0 : index
    %42 = vector.load %arg2[%c5, %c0_19, %c0_20] : memref<15x128x128xf32, #tpu.memory_space<vmem>>, vector<1x128x128xf32>
    %43 = vector.shape_cast %42 : vector<1x128x128xf32> to vector<128x128xf32>
    %cst_21 = arith.constant dense<0.000000e+00> : vector<64x128xf32>
    %44 = tpu.matmul %34, %43, %cst_21 {dimension_numbers = #tpu.dot_dimension_numbers<[1], [0], [0], [1], [0, 0, 1, 1], [], []>} : vector<64x128xf32>, vector<128x128xf32>, vector<64x128xf32> -> vector<64x128xf32>
    %45 = arith.addf %41, %44 : vector<64x128xf32>
    %c2 = arith.constant 2 : index
    %c0_22 = arith.constant 0 : index
    %46 = vector.load %arg3[%c2, %c0_22] : memref<12x128xf32, #tpu.memory_space<vmem>>, vector<1x128xf32>
    %47 = vector.broadcast %46 : vector<1x128xf32> to vector<64x128xf32>
    %48 = arith.mulf %45, %47 : vector<64x128xf32>
    %c4_23 = arith.constant 4 : index
    %c0_24 = arith.constant 0 : index
    %49 = vector.load %arg3[%c4_23, %c0_24] : memref<12x128xf32, #tpu.memory_space<vmem>>, vector<1x128xf32>
    %50 = vector.broadcast %49 : vector<1x128xf32> to vector<64x128xf32>
    %51 = arith.addf %48, %50 : vector<64x128xf32>
    %cst_25 = arith.constant 0.000000e+00 : f32
    %52 = vector.broadcast %cst_25 : f32 to vector<64x128xf32>
    %53 = arith.maximumf %51, %52 : vector<64x128xf32>
    %cst_26 = arith.constant 0.000000e+00 : f32
    %54 = vector.broadcast %cst_26 : f32 to vector<64x128xf32>
    %55 = arith.select %18, %53, %54 : vector<64x128xi1>, vector<64x128xf32>
    %c1_i32_27 = arith.constant 1 : i32
    %56 = tpu.dynamic_rotate %55 by %c1_i32_27 dim 0 : vector<64x128xf32>, i32 -> vector<64x128xf32>
    %c63_i32_28 = arith.constant 63 : i32
    %57 = tpu.dynamic_rotate %55 by %c63_i32_28 dim 0 : vector<64x128xf32>, i32 -> vector<64x128xf32>
    %c6 = arith.constant 6 : index
    %c0_29 = arith.constant 0 : index
    %c0_30 = arith.constant 0 : index
    %58 = vector.load %arg2[%c6, %c0_29, %c0_30] : memref<15x128x128xf32, #tpu.memory_space<vmem>>, vector<1x128x128xf32>
    %59 = vector.shape_cast %58 : vector<1x128x128xf32> to vector<128x128xf32>
    %cst_31 = arith.constant dense<0.000000e+00> : vector<64x128xf32>
    %60 = tpu.matmul %56, %59, %cst_31 {dimension_numbers = #tpu.dot_dimension_numbers<[1], [0], [0], [1], [0, 0, 1, 1], [], []>} : vector<64x128xf32>, vector<128x128xf32>, vector<64x128xf32> -> vector<64x128xf32>
    %c7 = arith.constant 7 : index
    %c0_32 = arith.constant 0 : index
    %c0_33 = arith.constant 0 : index
    %61 = vector.load %arg2[%c7, %c0_32, %c0_33] : memref<15x128x128xf32, #tpu.memory_space<vmem>>, vector<1x128x128xf32>
    %62 = vector.shape_cast %61 : vector<1x128x128xf32> to vector<128x128xf32>
    %cst_34 = arith.constant dense<0.000000e+00> : vector<64x128xf32>
    %63 = tpu.matmul %55, %62, %cst_34 {dimension_numbers = #tpu.dot_dimension_numbers<[1], [0], [0], [1], [0, 0, 1, 1], [], []>} : vector<64x128xf32>, vector<128x128xf32>, vector<64x128xf32> -> vector<64x128xf32>
    %64 = arith.addf %60, %63 : vector<64x128xf32>
    %c8 = arith.constant 8 : index
    %c0_35 = arith.constant 0 : index
    %c0_36 = arith.constant 0 : index
    %65 = vector.load %arg2[%c8, %c0_35, %c0_36] : memref<15x128x128xf32, #tpu.memory_space<vmem>>, vector<1x128x128xf32>
    %66 = vector.shape_cast %65 : vector<1x128x128xf32> to vector<128x128xf32>
    %cst_37 = arith.constant dense<0.000000e+00> : vector<64x128xf32>
    %67 = tpu.matmul %57, %66, %cst_37 {dimension_numbers = #tpu.dot_dimension_numbers<[1], [0], [0], [1], [0, 0, 1, 1], [], []>} : vector<64x128xf32>, vector<128x128xf32>, vector<64x128xf32> -> vector<64x128xf32>
    %68 = arith.addf %64, %67 : vector<64x128xf32>
    %c6_38 = arith.constant 6 : index
    %c0_39 = arith.constant 0 : index
    %69 = vector.load %arg3[%c6_38, %c0_39] : memref<12x128xf32, #tpu.memory_space<vmem>>, vector<1x128xf32>
    %70 = vector.broadcast %69 : vector<1x128xf32> to vector<64x128xf32>
    %71 = arith.mulf %68, %70 : vector<64x128xf32>
    %c8_40 = arith.constant 8 : index
    %c0_41 = arith.constant 0 : index
    %72 = vector.load %arg3[%c8_40, %c0_41] : memref<12x128xf32, #tpu.memory_space<vmem>>, vector<1x128xf32>
    %73 = vector.broadcast %72 : vector<1x128xf32> to vector<64x128xf32>
    %74 = arith.addf %71, %73 : vector<64x128xf32>
    %75 = arith.addf %74, %32 : vector<64x128xf32>
    %cst_42 = arith.constant 0.000000e+00 : f32
    %76 = vector.broadcast %cst_42 : f32 to vector<64x128xf32>
    %77 = arith.maximumf %75, %76 : vector<64x128xf32>
    %cst_43 = arith.constant 0.000000e+00 : f32
    %78 = vector.broadcast %cst_43 : f32 to vector<64x128xf32>
    %79 = arith.select %18, %77, %78 : vector<64x128xi1>, vector<64x128xf32>
    %c1_i32_44 = arith.constant 1 : i32
    %80 = tpu.dynamic_rotate %79 by %c1_i32_44 dim 0 : vector<64x128xf32>, i32 -> vector<64x128xf32>
    %c63_i32_45 = arith.constant 63 : i32
    %81 = tpu.dynamic_rotate %79 by %c63_i32_45 dim 0 : vector<64x128xf32>, i32 -> vector<64x128xf32>
    %c9 = arith.constant 9 : index
    %c0_46 = arith.constant 0 : index
    %c0_47 = arith.constant 0 : index
    %82 = vector.load %arg2[%c9, %c0_46, %c0_47] : memref<15x128x128xf32, #tpu.memory_space<vmem>>, vector<1x128x128xf32>
    %83 = vector.shape_cast %82 : vector<1x128x128xf32> to vector<128x128xf32>
    %cst_48 = arith.constant dense<0.000000e+00> : vector<64x128xf32>
    %84 = tpu.matmul %80, %83, %cst_48 {dimension_numbers = #tpu.dot_dimension_numbers<[1], [0], [0], [1], [0, 0, 1, 1], [], []>} : vector<64x128xf32>, vector<128x128xf32>, vector<64x128xf32> -> vector<64x128xf32>
    %c10 = arith.constant 10 : index
    %c0_49 = arith.constant 0 : index
    %c0_50 = arith.constant 0 : index
    %85 = vector.load %arg2[%c10, %c0_49, %c0_50] : memref<15x128x128xf32, #tpu.memory_space<vmem>>, vector<1x128x128xf32>
    %86 = vector.shape_cast %85 : vector<1x128x128xf32> to vector<128x128xf32>
    %cst_51 = arith.constant dense<0.000000e+00> : vector<64x128xf32>
    %87 = tpu.matmul %79, %86, %cst_51 {dimension_numbers = #tpu.dot_dimension_numbers<[1], [0], [0], [1], [0, 0, 1, 1], [], []>} : vector<64x128xf32>, vector<128x128xf32>, vector<64x128xf32> -> vector<64x128xf32>
    %88 = arith.addf %84, %87 : vector<64x128xf32>
    %c11 = arith.constant 11 : index
    %c0_52 = arith.constant 0 : index
    %c0_53 = arith.constant 0 : index
    %89 = vector.load %arg2[%c11, %c0_52, %c0_53] : memref<15x128x128xf32, #tpu.memory_space<vmem>>, vector<1x128x128xf32>
    %90 = vector.shape_cast %89 : vector<1x128x128xf32> to vector<128x128xf32>
    %cst_54 = arith.constant dense<0.000000e+00> : vector<64x128xf32>
    %91 = tpu.matmul %81, %90, %cst_54 {dimension_numbers = #tpu.dot_dimension_numbers<[1], [0], [0], [1], [0, 0, 1, 1], [], []>} : vector<64x128xf32>, vector<128x128xf32>, vector<64x128xf32> -> vector<64x128xf32>
    %92 = arith.addf %88, %91 : vector<64x128xf32>
    %c3_55 = arith.constant 3 : index
    %c0_56 = arith.constant 0 : index
    %93 = vector.load %arg3[%c3_55, %c0_56] : memref<12x128xf32, #tpu.memory_space<vmem>>, vector<1x128xf32>
    %94 = vector.broadcast %93 : vector<1x128xf32> to vector<64x128xf32>
    %95 = arith.mulf %92, %94 : vector<64x128xf32>
    %c5_57 = arith.constant 5 : index
    %c0_58 = arith.constant 0 : index
    %96 = vector.load %arg3[%c5_57, %c0_58] : memref<12x128xf32, #tpu.memory_space<vmem>>, vector<1x128xf32>
    %97 = vector.broadcast %96 : vector<1x128xf32> to vector<64x128xf32>
    %98 = arith.addf %95, %97 : vector<64x128xf32>
    %cst_59 = arith.constant 0.000000e+00 : f32
    %99 = vector.broadcast %cst_59 : f32 to vector<64x128xf32>
    %100 = arith.maximumf %98, %99 : vector<64x128xf32>
    %cst_60 = arith.constant 0.000000e+00 : f32
    %101 = vector.broadcast %cst_60 : f32 to vector<64x128xf32>
    %102 = arith.select %18, %100, %101 : vector<64x128xi1>, vector<64x128xf32>
    %c1_i32_61 = arith.constant 1 : i32
    %103 = tpu.dynamic_rotate %102 by %c1_i32_61 dim 0 : vector<64x128xf32>, i32 -> vector<64x128xf32>
    %c63_i32_62 = arith.constant 63 : i32
    %104 = tpu.dynamic_rotate %102 by %c63_i32_62 dim 0 : vector<64x128xf32>, i32 -> vector<64x128xf32>
    %c12 = arith.constant 12 : index
    %c0_63 = arith.constant 0 : index
    %c0_64 = arith.constant 0 : index
    %105 = vector.load %arg2[%c12, %c0_63, %c0_64] : memref<15x128x128xf32, #tpu.memory_space<vmem>>, vector<1x128x128xf32>
    %106 = vector.shape_cast %105 : vector<1x128x128xf32> to vector<128x128xf32>
    %cst_65 = arith.constant dense<0.000000e+00> : vector<64x128xf32>
    %107 = tpu.matmul %103, %106, %cst_65 {dimension_numbers = #tpu.dot_dimension_numbers<[1], [0], [0], [1], [0, 0, 1, 1], [], []>} : vector<64x128xf32>, vector<128x128xf32>, vector<64x128xf32> -> vector<64x128xf32>
    %c13 = arith.constant 13 : index
    %c0_66 = arith.constant 0 : index
    %c0_67 = arith.constant 0 : index
    %108 = vector.load %arg2[%c13, %c0_66, %c0_67] : memref<15x128x128xf32, #tpu.memory_space<vmem>>, vector<1x128x128xf32>
    %109 = vector.shape_cast %108 : vector<1x128x128xf32> to vector<128x128xf32>
    %cst_68 = arith.constant dense<0.000000e+00> : vector<64x128xf32>
    %110 = tpu.matmul %102, %109, %cst_68 {dimension_numbers = #tpu.dot_dimension_numbers<[1], [0], [0], [1], [0, 0, 1, 1], [], []>} : vector<64x128xf32>, vector<128x128xf32>, vector<64x128xf32> -> vector<64x128xf32>
    %111 = arith.addf %107, %110 : vector<64x128xf32>
    %c14 = arith.constant 14 : index
    %c0_69 = arith.constant 0 : index
    %c0_70 = arith.constant 0 : index
    %112 = vector.load %arg2[%c14, %c0_69, %c0_70] : memref<15x128x128xf32, #tpu.memory_space<vmem>>, vector<1x128x128xf32>
    %113 = vector.shape_cast %112 : vector<1x128x128xf32> to vector<128x128xf32>
    %cst_71 = arith.constant dense<0.000000e+00> : vector<64x128xf32>
    %114 = tpu.matmul %104, %113, %cst_71 {dimension_numbers = #tpu.dot_dimension_numbers<[1], [0], [0], [1], [0, 0, 1, 1], [], []>} : vector<64x128xf32>, vector<128x128xf32>, vector<64x128xf32> -> vector<64x128xf32>
    %115 = arith.addf %111, %114 : vector<64x128xf32>
    %c7_72 = arith.constant 7 : index
    %c0_73 = arith.constant 0 : index
    %116 = vector.load %arg3[%c7_72, %c0_73] : memref<12x128xf32, #tpu.memory_space<vmem>>, vector<1x128xf32>
    %117 = vector.broadcast %116 : vector<1x128xf32> to vector<64x128xf32>
    %118 = arith.mulf %115, %117 : vector<64x128xf32>
    %c9_74 = arith.constant 9 : index
    %c0_75 = arith.constant 0 : index
    %119 = vector.load %arg3[%c9_74, %c0_75] : memref<12x128xf32, #tpu.memory_space<vmem>>, vector<1x128xf32>
    %120 = vector.broadcast %119 : vector<1x128xf32> to vector<64x128xf32>
    %121 = arith.addf %118, %120 : vector<64x128xf32>
    %122 = arith.addf %121, %79 : vector<64x128xf32>
    %cst_76 = arith.constant 0.000000e+00 : f32
    %123 = vector.broadcast %cst_76 : f32 to vector<64x128xf32>
    %124 = arith.maximumf %122, %123 : vector<64x128xf32>
    %cst_77 = arith.constant 0.000000e+00 : f32
    %125 = vector.broadcast %cst_77 : f32 to vector<64x128xf32>
    %126 = arith.select %18, %124, %125 : vector<64x128xi1>, vector<64x128xf32>
    %cst_78 = arith.constant -3.40282347E+38 : f32
    %127 = vector.broadcast %cst_78 : f32 to vector<64x128xf32>
    %128 = arith.select %18, %126, %127 : vector<64x128xi1>, vector<64x128xf32>
    %129 = vector.shape_cast %128 : vector<64x128xf32> to vector<2x32x128xf32>
    %cst_79 = arith.constant dense<0xFF800000> : vector<2x128xf32>
    %130 = vector.multi_reduction <maximumf>, %129, %cst_79 [1] : vector<2x32x128xf32> to vector<2x128xf32>
    %cst_80 = arith.constant 0.000000e+00 : f32
    %131 = vector.broadcast %cst_80 : f32 to vector<6x128xf32>
    %132 = tpu.concatenate %130, %131 in 0 : vector<2x128xf32>, vector<6x128xf32> -> vector<8x128xf32>
    %c1_81 = arith.constant 1 : index
    %c0_82 = arith.constant 0 : index
    %c0_83 = arith.constant 0 : index
    %133 = vector.load %arg2[%c1_81, %c0_82, %c0_83] : memref<15x128x128xf32, #tpu.memory_space<vmem>>, vector<1x128x128xf32>
    %134 = vector.shape_cast %133 : vector<1x128x128xf32> to vector<128x128xf32>
    %cst_84 = arith.constant dense<0.000000e+00> : vector<8x128xf32>
    %135 = tpu.matmul %132, %134, %cst_84 {dimension_numbers = #tpu.dot_dimension_numbers<[1], [0], [0], [1], [0, 0, 1, 1], [], []>} : vector<8x128xf32>, vector<128x128xf32>, vector<8x128xf32> -> vector<8x128xf32>
    %c10_85 = arith.constant 10 : index
    %c0_86 = arith.constant 0 : index
    %136 = vector.load %arg3[%c10_85, %c0_86] : memref<12x128xf32, #tpu.memory_space<vmem>>, vector<1x128xf32>
    %137 = vector.broadcast %136 : vector<1x128xf32> to vector<8x128xf32>
    %138 = arith.addf %135, %137 : vector<8x128xf32>
    %cst_87 = arith.constant 0.000000e+00 : f32
    %139 = vector.broadcast %cst_87 : f32 to vector<8x128xf32>
    %140 = arith.maximumf %138, %139 : vector<8x128xf32>
    %c2_88 = arith.constant 2 : index
    %c0_89 = arith.constant 0 : index
    %c0_90 = arith.constant 0 : index
    %141 = vector.load %arg2[%c2_88, %c0_89, %c0_90] : memref<15x128x128xf32, #tpu.memory_space<vmem>>, vector<1x128x128xf32>
    %142 = vector.shape_cast %141 : vector<1x128x128xf32> to vector<128x128xf32>
    %cst_91 = arith.constant dense<0.000000e+00> : vector<8x128xf32>
    %143 = tpu.matmul %140, %142, %cst_91 {dimension_numbers = #tpu.dot_dimension_numbers<[1], [0], [0], [1], [0, 0, 1, 1], [], []>} : vector<8x128xf32>, vector<128x128xf32>, vector<8x128xf32> -> vector<8x128xf32>
    %c11_92 = arith.constant 11 : index
    %c0_93 = arith.constant 0 : index
    %144 = vector.load %arg3[%c11_92, %c0_93] : memref<12x128xf32, #tpu.memory_space<vmem>>, vector<1x128xf32>
    %145 = vector.broadcast %144 : vector<1x128xf32> to vector<8x128xf32>
    %146 = arith.addf %143, %145 : vector<8x128xf32>
    %147 = arith.negf %146 : vector<8x128xf32>
    %148 = math.exp %147 : vector<8x128xf32>
    %cst_94 = arith.constant 1.000000e+00 : f32
    %149 = vector.broadcast %cst_94 : f32 to vector<8x128xf32>
    %150 = arith.addf %149, %148 : vector<8x128xf32>
    %151 = arith.divf %149, %150 : vector<8x128xf32>
    %c0_95 = arith.constant 0 : index
    %c0_96 = arith.constant 0 : index
    %152 = vector.load %arg4[%c0_95, %c0_96] : memref<8x128xf32, #tpu.memory_space<vmem>>, vector<8x128xf32>
    tpu.vector_store %arg4[%c0_95, %c0_96], %151 {strides = array<i32>} : memref<8x128xf32, #tpu.memory_space<vmem>>, vector<8x128xf32>,
    return
  }
  func.func @transform_0(%arg0: i32) -> (i32, i32) {
    %c0_i32 = arith.constant 0 : i32
    %c0_i32_0 = arith.constant 0 : i32
    %c0_i32_1 = arith.constant 0 : i32
    return %c0_i32, %c0_i32_0 : i32, i32
  }
  func.func @transform_1(%arg0: i32) -> (i32, i32, i32) {
    %c0_i32 = arith.constant 0 : i32
    %c0_i32_0 = arith.constant 0 : i32
    %c0_i32_1 = arith.constant 0 : i32
    %c0_i32_2 = arith.constant 0 : i32
    return %c0_i32, %c0_i32_0, %c0_i32_1 : i32, i32, i32
  }
  func.func @transform_2(%arg0: i32) -> (i32, i32) {
    %c0_i32 = arith.constant 0 : i32
    %c0_i32_0 = arith.constant 0 : i32
    %c0_i32_1 = arith.constant 0 : i32
    return %c0_i32, %c0_i32_0 : i32, i32
  }
  func.func @transform_3(%arg0: i32) -> (i32, i32) {
    %c0_i32 = arith.constant 0 : i32
    %c0_i32_0 = arith.constant 0 : i32
    %c0_i32_1 = arith.constant 0 : i32
    return %c0_i32, %c0_i32_0 : i32, i32
  }
}

</mosaic_0001>

<llo_original>
// kernel: tpu_custom_call.1
$region0: #{tpu_custom_call.1}
  #allocation0 [shape = 'u32[]', space=smem, size = 0x4, offset = 0x4, fixed_abs, tag = 'smem constant byte address 0x4 - core index']
  #allocation1 [shape = 'u32[144,128]{1,0:T(1,128)}', space=vmem, size = 0x12000, scoped, tag = 'internal scratch']
  %s0 = inlined_call_operand.hbm [shape: f32[64,128], index: 0, kind: input, shape index: {}]
  %s1 = inlined_call_operand.hbm [shape: f32[15,128,128], index: 1, kind: input, shape index: {}]
  %s2 = inlined_call_operand.hbm [shape: f32[12,128], index: 2, kind: input, shape index: {}]
  %s3 = inlined_call_operand.hbm [shape: f32[8,128], index: 3, kind: output, shape index: {}]
  %s4 = sld [smem:[#allocation0]]
  $region34: #{tpu_custom_call.1} parent=0
    _
  %s6 = ssub.s32 1, %s4
  %s7 = scalar_select 0, %s6, %s4
  $region1: #{tpu_custom_call.1} parent=0
    #allocation2 [shape = 'u8[32768]{0}', space=vmem, size = 0x8000, scoped, tag = 'input window, operand 0, single buffered']
    #allocation3 [shape = 's32[1]{0}', space=sflag, size = 0x4, scoped, tag = 'scoped memory for tpu_custom_call.1']
    #allocation4 [shape = 's32[1]{0}', space=sflag, size = 0x4, scoped, tag = 'scoped memory for tpu_custom_call.1']
    #allocation5 [shape = 'u8[983040]{0}', space=vmem, size = 0xf0000, scoped, tag = 'input window, operand 1, single buffered']
    #allocation6 [shape = 's32[1]{0}', space=sflag, size = 0x4, scoped, tag = 'scoped memory for tpu_custom_call.1']
    #allocation7 [shape = 'u8[8192]{0}', space=vmem, size = 0x2000, scoped, tag = 'input window, operand 2, single buffered']
    #allocation8 [shape = 'u8[4096]{0}', space=vmem, size = 0x1000, scoped, tag = 'output window, operand 0, single buffered']
    %8 = vsyncpa [#allocation3], 0
    %9 = vsyncpa [#allocation6], 0
    %10 = vsyncpa [#allocation4], 0
    // Predicated region
    $region2: #{tpu_custom_call.1} parent=1 // pred_check
      _
    $region3: #{tpu_custom_call.1} parent=1 // pred_check_branch
      %12 = sbr.rel (0) target = $region5
    $region4: #{tpu_custom_call.1} parent=1 // pred_region
      %s14 = ssub.s32 1024, 1024
      %15 = vsyncadd [#allocation3], %s14
      %s16 = sshll.u32 [#allocation2], 4
      %s17 = int_to_ptr.vmem [resolvable:$true] %s16
      %22 = dma.hbm_to_vmem [thread:$0]  %s0, 1024, %s17, [#allocation3], 128, 128, 8
    $region5: #{tpu_custom_call.1} parent=1 // pred_fallthru
      _
    // Predicated region
    $region6: #{tpu_custom_call.1} parent=1 // pred_check
      _
    $region7: #{tpu_custom_call.1} parent=1 // pred_check_branch
      %24 = sbr.rel (0) target = $region9
    $region8: #{tpu_custom_call.1} parent=1 // pred_region
      %s26 = ssub.s32 30720, 30720
      %27 = vsyncadd [#allocation6], %s26
      %s28 = sshll.u32 [#allocation5], 4
      %s29 = int_to_ptr.vmem [resolvable:$true] %s28
      %34 = dma.hbm_to_vmem [thread:$0]  %s1, 30720, %s29, [#allocation6], 128, 128, 8
    $region9: #{tpu_custom_call.1} parent=1 // pred_fallthru
      _
    // Predicated region
    $region10: #{tpu_custom_call.1} parent=1 // pred_check
      _
    $region11: #{tpu_custom_call.1} parent=1 // pred_check_branch
      %36 = sbr.rel (0) target = $region13
    $region12: #{tpu_custom_call.1} parent=1 // pred_region
      %s38 = ssub.s32 256, 256
      %39 = vsyncadd [#allocation6], %s38
      %s40 = sshll.u32 [#allocation7], 4
      %s41 = int_to_ptr.vmem [resolvable:$true] %s40
      %46 = dma.hbm_to_vmem [thread:$0]  %s2, 256, %s41, [#allocation6], 128, 128, 8
    $region13: #{tpu_custom_call.1} parent=1 // pred_fallthru
      _
    // Predicated region
    $region14: #{tpu_custom_call.1} parent=1 // pred_check
      _
    $region15: #{tpu_custom_call.1} parent=1 // pred_check_branch
      %48 = sbr.rel (0) target = $region17
    $region16: #{tpu_custom_call.1} parent=1 // pred_region
      %49 = dma.done [#allocation3], 1024
    $region17: #{tpu_custom_call.1} parent=1 // pred_fallthru
      _
    // Predicated region
    $region18: #{tpu_custom_call.1} parent=1 // pred_check
      _
    $region19: #{tpu_custom_call.1} parent=1 // pred_check_branch
      %51 = sbr.rel (0) target = $region21
    $region20: #{tpu_custom_call.1} parent=1 // pred_region
      %52 = dma.done [#allocation6], 30720
    $region21: #{tpu_custom_call.1} parent=1 // pred_fallthru
      _
    // Predicated region
    $region22: #{tpu_custom_call.1} parent=1 // pred_check
      _
    $region23: #{tpu_custom_call.1} parent=1 // pred_check_branch
      %54 = sbr.rel (0) target = $region25
    $region24: #{tpu_custom_call.1} parent=1 // pred_region
      %55 = dma.done [#allocation6], 256
    $region25: #{tpu_custom_call.1} parent=1 // pred_fallthru
      _
    %v56 = vlaneseq
    %v57 = vshrl.u32 %v56, 7
    %v58 = vadd.s32 %v57, 8
    %v59 = vadd.s32 %v57, 16
    %v60 = vadd.s32 %v57, 24
    %v61 = vadd.s32 %v57, 32
    %v62 = vadd.s32 %v57, 40
    %v63 = vadd.s32 %v57, 48
    %v64 = vadd.s32 %v57, 56
    %vm65 = vcmp.lt.s32.totalorder %v57, 0
    %v66 = vsub.s32 0, %v57
    %v67 = vsel %vm65, %v66, %v57
    %v68 = vshrl.u32 %v67, 5
    %v69 = vand.u32 %v67, 31
    %v70 = vsub.s32 0, %v69
    %v71 = vsel %vm65, %v70, %v69
    %vm72 = vcmp.lt.s32.totalorder %v58, 0
    %v73 = vsub.s32 0, %v58
    %v74 = vsel %vm72, %v73, %v58
    %v75 = vshrl.u32 %v74, 5
    %v76 = vand.u32 %v74, 31
    %v77 = vsub.s32 0, %v76
    %v78 = vsel %vm72, %v77, %v76
    %vm79 = vcmp.lt.s32.totalorder %v59, 0
    %v80 = vsub.s32 0, %v59
    %v81 = vsel %vm79, %v80, %v59
    %v82 = vshrl.u32 %v81, 5
    %v83 = vand.u32 %v81, 31
    %v84 = vsub.s32 0, %v83
    %v85 = vsel %vm79, %v84, %v83
    %vm86 = vcmp.lt.s32.totalorder %v60, 0
    %v87 = vsub.s32 0, %v60
    %v88 = vsel %vm86, %v87, %v60
    %v89 = vshrl.u32 %v88, 5
    %v90 = vand.u32 %v88, 31
    %v91 = vsub.s32 0, %v90
    %v92 = vsel %vm86, %v91, %v90
    %vm93 = vcmp.lt.s32.totalorder %v61, 0
    %v94 = vsub.s32 0, %v61
    %v95 = vsel %vm93, %v94, %v61
    %v96 = vshrl.u32 %v95, 5
    %v97 = vand.u32 %v95, 31
    %v98 = vsub.s32 0, %v97
    %v99 = vsel %vm93, %v98, %v97
    %vm100 = vcmp.lt.s32.totalorder %v62, 0
    %v101 = vsub.s32 0, %v62
    %v102 = vsel %vm100, %v101, %v62
    %v103 = vshrl.u32 %v102, 5
    %v104 = vand.u32 %v102, 31
    %v105 = vsub.s32 0, %v104
    %v106 = vsel %vm100, %v105, %v104
    %vm107 = vcmp.lt.s32.totalorder %v63, 0
    %v108 = vsub.s32 0, %v63
    %v109 = vsel %vm107, %v108, %v63
    %v110 = vshrl.u32 %v109, 5
    %v111 = vand.u32 %v109, 31
    %v112 = vsub.s32 0, %v111
    %v113 = vsel %vm107, %v112, %v111
    %vm114 = vcmp.lt.s32.totalorder %v64, 0
    %v115 = vsub.s32 0, %v64
    %v116 = vsel %vm114, %v115, %v64
    %v117 = vshrl.u32 %v116, 5
    %v118 = vand.u32 %v116, 31
    %v119 = vsub.s32 0, %v118
    %v120 = vsel %vm114, %v119, %v118
    %vm121 = vcmp.ne.s32.totalorder %v71, 0
    %vm122 = vcmp.ne.s32.totalorder %v78, 0
    %vm123 = vcmp.ne.s32.totalorder %v85, 0
    %vm124 = vcmp.ne.s32.totalorder %v92, 0
    %vm125 = vcmp.ne.s32.totalorder %v99, 0
    %vm126 = vcmp.ne.s32.totalorder %v106, 0
    %vm127 = vcmp.ne.s32.totalorder %v113, 0
    %vm128 = vcmp.ne.s32.totalorder %v120, 0
    %vm129 = vcmp.lt.s32.totalorder %v71, 0
    %vm130 = vcmp.lt.s32.totalorder %v78, 0
    %vm131 = vcmp.lt.s32.totalorder %v85, 0
    %vm132 = vcmp.lt.s32.totalorder %v92, 0
    %vm133 = vcmp.lt.s32.totalorder %v99, 0
    %vm134 = vcmp.lt.s32.totalorder %v106, 0
    %vm135 = vcmp.lt.s32.totalorder %v113, 0
    %vm136 = vcmp.lt.s32.totalorder %v120, 0
    %vm137 = vmand %vm129, %vm121
    %vm138 = vmand %vm130, %vm122
    %vm139 = vmand %vm131, %vm123
    %vm140 = vmand %vm132, %vm124
    %vm141 = vmand %vm133, %vm125
    %vm142 = vmand %vm134, %vm126
    %vm143 = vmand %vm135, %vm127
    %vm144 = vmand %vm136, %vm128
    %v145 = vadd.s32 %v71, 32
    %v146 = vadd.s32 %v78, 32
    %v147 = vadd.s32 %v85, 32
    %v148 = vadd.s32 %v92, 32
    %v149 = vadd.s32 %v99, 32
    %v150 = vadd.s32 %v106, 32
    %v151 = vadd.s32 %v113, 32
    %v152 = vadd.s32 %v120, 32
    %v153 = vsel %vm137, %v145, %v71
    %v154 = vsel %vm138, %v146, %v78
    %v155 = vsel %vm139, %v147, %v85
    %v156 = vsel %vm140, %v148, %v92
    %v157 = vsel %vm141, %v149, %v99
    %v158 = vsel %vm142, %v150, %v106
    %v159 = vsel %vm143, %v151, %v113
    %v160 = vsel %vm144, %v152, %v120
    %vm161 = vcmp.lt.s32.totalorder %v153, 28
    %vm162 = vcmp.lt.s32.totalorder %v154, 28
    %vm163 = vcmp.lt.s32.totalorder %v155, 28
    %vm164 = vcmp.lt.s32.totalorder %v156, 28
    %vm165 = vcmp.lt.s32.totalorder %v157, 28
    %vm166 = vcmp.lt.s32.totalorder %v158, 28
    %vm167 = vcmp.lt.s32.totalorder %v159, 28
    %vm168 = vcmp.lt.s32.totalorder %v160, 28
    %v169 = vld [vmem:[#allocation2] sm:$0xff]
    %v170 = vld [vmem:[#allocation2 + $0x8] sm:$0xff]
    %v171 = vld [vmem:[#allocation2 + $0x10] sm:$0xff]
    %v172 = vld [vmem:[#allocation2 + $0x18] sm:$0xff]
    %v173 = vld [vmem:[#allocation2 + $0x20] sm:$0xff]
    %v174 = vld [vmem:[#allocation2 + $0x28] sm:$0xff]
    %v175 = vld [vmem:[#allocation2 + $0x30] sm:$0xff]
    %v176 = vld [vmem:[#allocation2 + $0x38] sm:$0xff]
    %v177 = vld [vmem:[#allocation5] sm:$0xff]
    %v178 = vld [vmem:[#allocation5 + $0x8] sm:$0xff]
    %v179 = vld [vmem:[#allocation5 + $0x10] sm:$0xff]
    %v180 = vld [vmem:[#allocation5 + $0x18] sm:$0xff]
    %v181 = vld [vmem:[#allocation5 + $0x20] sm:$0xff]
    %v182 = vld [vmem:[#allocation5 + $0x28] sm:$0xff]
    %v183 = vld [vmem:[#allocation5 + $0x30] sm:$0xff]
    %v184 = vld [vmem:[#allocation5 + $0x38] sm:$0xff]
    %v185 = vld [vmem:[#allocation5 + $0x40] sm:$0xff]
    %v186 = vld [vmem:[#allocation5 + $0x48] sm:$0xff]
    %v187 = vld [vmem:[#allocation5 + $0x50] sm:$0xff]
    %v188 = vld [vmem:[#allocation5 + $0x58] sm:$0xff]
    %v189 = vld [vmem:[#allocation5 + $0x60] sm:$0xff]
    %v190 = vld [vmem:[#allocation5 + $0x68] sm:$0xff]
    %v191 = vld [vmem:[#allocation5 + $0x70] sm:$0xff]
    %v192 = vld [vmem:[#allocation5 + $0x78] sm:$0xff]
    %193 = vmatprep.subr.mxu0 0.0
    %194 = vmatpush1.msra.mxu0 %v177
    %195 = vmatprep.subr.mxu0 0.0
    %196 = vmatpush1.msra.mxu0 %v178
    %197 = vmatprep.subr.mxu0 0.0
    %198 = vmatpush1.msra.mxu0 %v179
    %199 = vmatprep.subr.mxu0 0.0
    %200 = vmatpush1.msra.mxu0 %v180
    %201 = vmatprep.subr.mxu0 0.0
    %202 = vmatpush1.msra.mxu0 %v181
    %203 = vmatprep.subr.mxu0 0.0
    %204 = vmatpush1.msra.mxu0 %v182
    %205 = vmatprep.subr.mxu0 0.0
    %206 = vmatpush1.msra.mxu0 %v183
    %207 = vmatprep.subr.mxu0 0.0
    %208 = vmatpush1.msra.mxu0 %v184
    %209 = vmatprep.subr.mxu0 0.0
    %210 = vmatpush1.msra.mxu0 %v185
    %211 = vmatprep.subr.mxu0 0.0
    %212 = vmatpush1.msra.mxu0 %v186
    %213 = vmatprep.subr.mxu0 0.0
    %214 = vmatpush1.msra.mxu0 %v187
    %215 = vmatprep.subr.mxu0 0.0
    %216 = vmatpush1.msra.mxu0 %v188
    %217 = vmatprep.subr.mxu0 0.0
    %218 = vmatpush1.msra.mxu0 %v189
    %219 = vmatprep.subr.mxu0 0.0
    %220 = vmatpush1.msra.mxu0 %v190
    %221 = vmatprep.subr.mxu0 0.0
    %222 = vmatpush1.msra.mxu0 %v191
    %223 = vmatprep.subr.mxu0 0.0
    %224 = vmatpush1.msra.mxu0 %v192
    %225 = vmatprep.subr.mxu0 0.0
    %226 = vmatpush1.msra.mxu0 0.0
    %227 = vmatprep.subr.mxu0 0.0
    %228 = vmatpush1.msra.mxu0 0.0
    %229 = vmatprep.subr.mxu0 0.0
    %230 = vmatpush1.msra.mxu0 0.0
    %231 = vmatprep.subr.mxu0 0.0
    %232 = vmatpush1.msra.mxu0 0.0
    %233 = vmatprep.subr.mxu0 0.0
    %234 = vmatpush1.msra.mxu0 0.0
    %235 = vmatprep.subr.mxu0 0.0
    %236 = vmatpush1.msra.mxu0 0.0
    %237 = vmatprep.subr.mxu0 0.0
    %238 = vmatpush1.msra.mxu0 0.0
    %239 = vmatprep.subr.mxu0 0.0
    %240 = vmatpush1.msra.mxu0 0.0
    %241 = vmatprep.subr.mxu0 0.0
    %242 = vmatpush1.msra.mxu0 0.0
    %243 = vmatprep.subr.mxu0 0.0
    %244 = vmatpush1.msra.mxu0 0.0
    %245 = vmatprep.subr.mxu0 0.0
    %246 = vmatpush1.msra.mxu0 0.0
    %247 = vmatprep.subr.mxu0 0.0
    %248 = vmatpush1.msra.mxu0 0.0
    %249 = vmatprep.subr.mxu0 0.0
    %250 = vmatpush1.msra.mxu0 0.0
    %251 = vmatprep.subr.mxu0 0.0
    %252 = vmatpush1.msra.mxu0 0.0
    %253 = vmatprep.subr.mxu0 0.0
    %254 = vmatpush1.msra.mxu0 0.0
    %255 = vmatprep.subr.mxu0 0.0
    %256 = vmatpush1.msra.mxu0 0.0
    %257 = vmatprep.mubr.f32.mxu0 0.0
    %258 = vmatmul.mubr.f32.gmra.mrb[0].mxu0 %v169
    %v259 = vpop.f32.mrb[0].mxu0
    %v260 = vadd.f32 0.0, %v259
    %v261 = vpop.f32.mrb[0].mxu0
    %262 = vmatprep.mubr.f32.mxu0 0.0
    %263 = vmatmul.mubr.f32.gmra.mrb[0].mxu0 %v170
    %v264 = vpop.f32.mrb[0].mxu0
    %v265 = vadd.f32 0.0, %v264
    %v266 = vpop.f32.mrb[0].mxu0
    %267 = vmatprep.mubr.f32.mxu0 0.0
    %268 = vmatmul.mubr.f32.gmra.mrb[0].mxu0 %v171
    %v269 = vpop.f32.mrb[0].mxu0
    %v270 = vadd.f32 0.0, %v269
    %v271 = vpop.f32.mrb[0].mxu0
    %272 = vmatprep.mubr.f32.mxu0 0.0
    %273 = vmatmul.mubr.f32.gmra.mrb[0].mxu0 %v172
    %v274 = vpop.f32.mrb[0].mxu0
    %v275 = vadd.f32 0.0, %v274
    %v276 = vpop.f32.mrb[0].mxu0
    %277 = vmatprep.mubr.f32.mxu0 0.0
    %278 = vmatmul.mubr.f32.gmra.mrb[0].mxu0 %v173
    %v279 = vpop.f32.mrb[0].mxu0
    %v280 = vadd.f32 0.0, %v279
    %v281 = vpop.f32.mrb[0].mxu0
    %282 = vmatprep.mubr.f32.mxu0 0.0
    %283 = vmatmul.mubr.f32.gmra.mrb[0].mxu0 %v174
    %v284 = vpop.f32.mrb[0].mxu0
    %v285 = vadd.f32 0.0, %v284
    %v286 = vpop.f32.mrb[0].mxu0
    %287 = vmatprep.mubr.f32.mxu0 0.0
    %288 = vmatmul.mubr.f32.gmra.mrb[0].mxu0 %v175
    %v289 = vpop.f32.mrb[0].mxu0
    %v290 = vadd.f32 0.0, %v289
    %v291 = vpop.f32.mrb[0].mxu0
    %292 = vmatprep.mubr.f32.mxu0 0.0
    %293 = vmatmul.mubr.f32.gmra.mrb[0].mxu0 %v176
    %v294 = vpop.f32.mrb[0].mxu0
    %v295 = vadd.f32 0.0, %v294
    %v296 = vpop.f32.mrb[0].mxu0
    %297 = vdwg.mxu0
    %v298 = vld [vmem:[#allocation7] sm:$0x1]
    %v299 = vlaneseq
    %v300 = vshrl.u32 %v299, 7
    %v301 = vsub.s32 0, %v300
    %v302 = vrot.slane %v298, %v301
    %v303 = vmul.f32 %v260, %v302
    %v304 = vmul.f32 %v265, %v302
    %v305 = vmul.f32 %v270, %v302
    %v306 = vmul.f32 %v275, %v302
    %v307 = vmul.f32 %v280, %v302
    %v308 = vmul.f32 %v285, %v302
    %v309 = vmul.f32 %v290, %v302
    %v310 = vmul.f32 %v295, %v302
    %v311 = vld [vmem:[#allocation7 + $0x1] sm:$0x1]
    %v312 = vlaneseq
    %v313 = vshrl.u32 %v312, 7
    %v314 = vsub.s32 0, %v313
    %v315 = vrot.slane %v311, %v314
    %v316 = vadd.f32 %v303, %v315
    %v317 = vadd.f32 %v304, %v315
    %v318 = vadd.f32 %v305, %v315
    %v319 = vadd.f32 %v306, %v315
    %v320 = vadd.f32 %v307, %v315
    %v321 = vadd.f32 %v308, %v315
    %v322 = vadd.f32 %v309, %v315
    %v323 = vadd.f32 %v310, %v315
    %v324 = vmax.f32 %v316, 0.0
    %v325 = vmax.f32 %v317, 0.0
    %v326 = vmax.f32 %v318, 0.0
    %v327 = vmax.f32 %v319, 0.0
    %v328 = vmax.f32 %v320, 0.0
    %v329 = vmax.f32 %v321, 0.0
    %v330 = vmax.f32 %v322, 0.0
    %v331 = vmax.f32 %v323, 0.0
    %v332 = vsel %vm161, %v324, 0.0
    %v333 = vsel %vm162, %v325, 0.0
    %v334 = vsel %vm163, %v326, 0.0
    %v335 = vsel %vm164, %v327, 0.0
    %v336 = vsel %vm165, %v328, 0.0
    %v337 = vsel %vm166, %v329, 0.0
    %v338 = vsel %vm167, %v330, 0.0
    %v339 = vsel %vm168, %v331, 0.0
    %v340 = vrot.slane %v332, 7
    %v341 = vrot.slane %v333, 7
    %v342 = vrot.slane %v334, 7
    %v343 = vrot.slane %v335, 7
    %v344 = vrot.slane %v336, 7
    %v345 = vrot.slane %v337, 7
    %v346 = vrot.slane %v338, 7
    %v347 = vrot.slane %v339, 7
    %vm348 = vcmp.lt.s32.totalorder %v57, 1
    %v349 = vsel %vm348, %v346, %v347
    %v350 = vsel %vm348, %v345, %v346
    %v351 = vsel %vm348, %v344, %v345
    %v352 = vsel %vm348, %v343, %v344
    %v353 = vsel %vm348, %v342, %v343
    %v354 = vsel %vm348, %v341, %v342
    %v355 = vsel %vm348, %v340, %v341
    %v356 = vsel %vm348, %v347, %v340
    %v357 = vrot.slane %v332, 1
    %v358 = vrot.slane %v333, 1
    %v359 = vrot.slane %v334, 1
    %v360 = vrot.slane %v335, 1
    %v361 = vrot.slane %v336, 1
    %v362 = vrot.slane %v337, 1
    %v363 = vrot.slane %v338, 1
    %v364 = vrot.slane %v339, 1
    %vm365 = vcmp.lt.s32.totalorder %v57, 7
    %v366 = vsel %vm365, %v363, %v364
    %v367 = vsel %vm365, %v362, %v363
    %v368 = vsel %vm365, %v361, %v362
    %v369 = vsel %vm365, %v360, %v361
    %v370 = vsel %vm365, %v359, %v360
    %v371 = vsel %vm365, %v358, %v359
    %v372 = vsel %vm365, %v357, %v358
    %v373 = vsel %vm365, %v364, %v357
    %s374 = scalar_lea.vmem [#allocation5], 384
    %v375 = vld [vmem:[%s374] sm:$0xff]
    %v376 = vld [vmem:[%s374 + $0x8] sm:$0xff]
    %v377 = vld [vmem:[%s374 + $0x10] sm:$0xff]
    %v378 = vld [vmem:[%s374 + $0x18] sm:$0xff]
    %v379 = vld [vmem:[%s374 + $0x20] sm:$0xff]
    %v380 = vld [vmem:[%s374 + $0x28] sm:$0xff]
    %v381 = vld [vmem:[%s374 + $0x30] sm:$0xff]
    %v382 = vld [vmem:[%s374 + $0x38] sm:$0xff]
    %v383 = vld [vmem:[%s374 + $0x40] sm:$0xff]
    %v384 = vld [vmem:[%s374 + $0x48] sm:$0xff]
    %v385 = vld [vmem:[%s374 + $0x50] sm:$0xff]
    %v386 = vld [vmem:[%s374 + $0x58] sm:$0xff]
    %v387 = vld [vmem:[%s374 + $0x60] sm:$0xff]
    %v388 = vld [vmem:[%s374 + $0x68] sm:$0xff]
    %v389 = vld [vmem:[%s374 + $0x70] sm:$0xff]
    %v390 = vld [vmem:[%s374 + $0x78] sm:$0xff]
    %s391 = scalar_lea.vmem [#allocation5], 512
    %v392 = vld [vmem:[%s391] sm:$0xff]
    %v393 = vld [vmem:[%s391 + $0x8] sm:$0xff]
    %v394 = vld [vmem:[%s391 + $0x10] sm:$0xff]
    %v395 = vld [vmem:[%s391 + $0x18] sm:$0xff]
    %v396 = vld [vmem:[%s391 + $0x20] sm:$0xff]
    %v397 = vld [vmem:[%s391 + $0x28] sm:$0xff]
    %v398 = vld [vmem:[%s391 + $0x30] sm:$0xff]
    %v399 = vld [vmem:[%s391 + $0x38] sm:$0xff]
    %v400 = vld [vmem:[%s391 + $0x40] sm:$0xff]
    %v401 = vld [vmem:[%s391 + $0x48] sm:$0xff]
    %v402 = vld [vmem:[%s391 + $0x50] sm:$0xff]
    %v403 = vld [vmem:[%s391 + $0x58] sm:$0xff]
    %v404 = vld [vmem:[%s391 + $0x60] sm:$0xff]
    %v405 = vld [vmem:[%s391 + $0x68] sm:$0xff]
    %v406 = vld [vmem:[%s391 + $0x70] sm:$0xff]
    %v407 = vld [vmem:[%s391 + $0x78] sm:$0xff]
    %408 = vmatprep.subr.mxu0 0.0
    %409 = vmatpush1.msra.mxu0 %v392
    %410 = vmatprep.subr.mxu0 0.0
    %411 = vmatpush1.msra.mxu0 %v393
    %412 = vmatprep.subr.mxu0 0.0
    %413 = vmatpush1.msra.mxu0 %v394
    %414 = vmatprep.subr.mxu0 0.0
    %415 = vmatpush1.msra.mxu0 %v395
    %416 = vmatprep.subr.mxu0 0.0
    %417 = vmatpush1.msra.mxu0 %v396
    %418 = vmatprep.subr.mxu0 0.0
    %419 = vmatpush1.msra.mxu0 %v397
    %420 = vmatprep.subr.mxu0 0.0
    %421 = vmatpush1.msra.mxu0 %v398
    %422 = vmatprep.subr.mxu0 0.0
    %423 = vmatpush1.msra.mxu0 %v399
    %424 = vmatprep.subr.mxu0 0.0
    %425 = vmatpush1.msra.mxu0 %v400
    %426 = vmatprep.subr.mxu0 0.0
    %427 = vmatpush1.msra.mxu0 %v401
    %428 = vmatprep.subr.mxu0 0.0
    %429 = vmatpush1.msra.mxu0 %v402
    %430 = vmatprep.subr.mxu0 0.0
    %431 = vmatpush1.msra.mxu0 %v403
    %432 = vmatprep.subr.mxu0 0.0
    %433 = vmatpush1.msra.mxu0 %v404
    %434 = vmatprep.subr.mxu0 0.0
    %435 = vmatpush1.msra.mxu0 %v405
    %436 = vmatprep.subr.mxu0 0.0
    %437 = vmatpush1.msra.mxu0 %v406
    %438 = vmatprep.subr.mxu0 0.0
    %439 = vmatpush1.msra.mxu0 %v407
    %440 = vmatprep.subr.mxu0 0.0
    %441 = vmatpush1.msra.mxu0 0.0
    %442 = vmatprep.subr.mxu0 0.0
    %443 = vmatpush1.msra.mxu0 0.0
    %444 = vmatprep.subr.mxu0 0.0
    %445 = vmatpush1.msra.mxu0 0.0
    %446 = vmatprep.subr.mxu0 0.0
    %447 = vmatpush1.msra.mxu0 0.0
    %448 = vmatprep.subr.mxu0 0.0
    %449 = vmatpush1.msra.mxu0 0.0
    %450 = vmatprep.subr.mxu0 0.0
    %451 = vmatpush1.msra.mxu0 0.0
    %452 = vmatprep.subr.mxu0 0.0
    %453 = vmatpush1.msra.mxu0 0.0
    %454 = vmatprep.subr.mxu0 0.0
    %455 = vmatpush1.msra.mxu0 0.0
    %456 = vmatprep.subr.mxu0 0.0
    %457 = vmatpush1.msra.mxu0 0.0
    %458 = vmatprep.subr.mxu0 0.0
    %459 = vmatpush1.msra.mxu0 0.0
    %460 = vmatprep.subr.mxu0 0.0
    %461 = vmatpush1.msra.mxu0 0.0
    %462 = vmatprep.subr.mxu0 0.0
    %463 = vmatpush1.msra.mxu0 0.0
    %464 = vmatprep.subr.mxu0 0.0
    %465 = vmatpush1.msra.mxu0 0.0
    %466 = vmatprep.subr.mxu0 0.0
    %467 = vmatpush1.msra.mxu0 0.0
    %468 = vmatprep.subr.mxu0 0.0
    %469 = vmatpush1.msra.mxu0 0.0
    %470 = vmatprep.subr.mxu0 0.0
    %471 = vmatpush1.msra.mxu0 0.0
    %472 = vmatprep.mubr.f32.mxu0 0.0
    %473 = vmatmul.mubr.f32.gmra.mrb[0].mxu0 %v332
    %v474 = vpop.f32.mrb[0].mxu0
    %v475 = vadd.f32 0.0, %v474
    %v476 = vpop.f32.mrb[0].mxu0
    %477 = vmatprep.mubr.f32.mxu0 0.0
    %478 = vmatmul.mubr.f32.gmra.mrb[0].mxu0 %v333
    %v479 = vpop.f32.mrb[0].mxu0
    %v480 = vadd.f32 0.0, %v479
    %v481 = vpop.f32.mrb[0].mxu0
    %482 = vmatprep.mubr.f32.mxu0 0.0
    %483 = vmatmul.mubr.f32.gmra.mrb[0].mxu0 %v334
    %v484 = vpop.f32.mrb[0].mxu0
    %v485 = vadd.f32 0.0, %v484
    %v486 = vpop.f32.mrb[0].mxu0
    %487 = vmatprep.mubr.f32.mxu0 0.0
    %488 = vmatmul.mubr.f32.gmra.mrb[0].mxu0 %v335
    %v489 = vpop.f32.mrb[0].mxu0
    %v490 = vadd.f32 0.0, %v489
    %v491 = vpop.f32.mrb[0].mxu0
    %492 = vmatprep.mubr.f32.mxu0 0.0
    %493 = vmatmul.mubr.f32.gmra.mrb[0].mxu0 %v336
    %v494 = vpop.f32.mrb[0].mxu0
    %v495 = vadd.f32 0.0, %v494
    %v496 = vpop.f32.mrb[0].mxu0
    %497 = vmatprep.mubr.f32.mxu0 0.0
    %498 = vmatmul.mubr.f32.gmra.mrb[0].mxu0 %v337
    %v499 = vpop.f32.mrb[0].mxu0
    %v500 = vadd.f32 0.0, %v499
    %v501 = vpop.f32.mrb[0].mxu0
    %502 = vmatprep.mubr.f32.mxu0 0.0
    %503 = vmatmul.mubr.f32.gmra.mrb[0].mxu0 %v338
    %v504 = vpop.f32.mrb[0].mxu0
    %v505 = vadd.f32 0.0, %v504
    %v506 = vpop.f32.mrb[0].mxu0
    %507 = vmatprep.mubr.f32.mxu0 0.0
    %508 = vmatmul.mubr.f32.gmra.mrb[0].mxu0 %v339
    %v509 = vpop.f32.mrb[0].mxu0
    %v510 = vadd.f32 0.0, %v509
    %v511 = vpop.f32.mrb[0].mxu0
    %512 = vdwg.mxu0
    %513 = vmatprep.subr.mxu0 0.0
    %514 = vmatpush1.msra.mxu0 %v375
    %515 = vmatprep.subr.mxu0 0.0
    %516 = vmatpush1.msra.mxu0 %v376
    %517 = vmatprep.subr.mxu0 0.0
    %518 = vmatpush1.msra.mxu0 %v377
    %519 = vmatprep.subr.mxu0 0.0
    %520 = vmatpush1.msra.mxu0 %v378
    %521 = vmatprep.subr.mxu0 0.0
    %522 = vmatpush1.msra.mxu0 %v379
    %523 = vmatprep.subr.mxu0 0.0
    %524 = vmatpush1.msra.mxu0 %v380
    %525 = vmatprep.subr.mxu0 0.0
    %526 = vmatpush1.msra.mxu0 %v381
    %527 = vmatprep.subr.mxu0 0.0
    %528 = vmatpush1.msra.mxu0 %v382
    %529 = vmatprep.subr.mxu0 0.0
    %530 = vmatpush1.msra.mxu0 %v383
    %531 = vmatprep.subr.mxu0 0.0
    %532 = vmatpush1.msra.mxu0 %v384
    %533 = vmatprep.subr.mxu0 0.0
    %534 = vmatpush1.msra.mxu0 %v385
    %535 = vmatprep.subr.mxu0 0.0
    %536 = vmatpush1.msra.mxu0 %v386
    %537 = vmatprep.subr.mxu0 0.0
    %538 = vmatpush1.msra.mxu0 %v387
    %539 = vmatprep.subr.mxu0 0.0
    %540 = vmatpush1.msra.mxu0 %v388
    %541 = vmatprep.subr.mxu0 0.0
    %542 = vmatpush1.msra.mxu0 %v389
    %543 = vmatprep.subr.mxu0 0.0
    %544 = vmatpush1.msra.mxu0 %v390
    %545 = vmatprep.subr.mxu0 0.0
    %546 = vmatpush1.msra.mxu0 0.0
    %547 = vmatprep.subr.mxu0 0.0
    %548 = vmatpush1.msra.mxu0 0.0
    %549 = vmatprep.subr.mxu0 0.0
    %550 = vmatpush1.msra.mxu0 0.0
    %551 = vmatprep.subr.mxu0 0.0
    %552 = vmatpush1.msra.mxu0 0.0
    %553 = vmatprep.subr.mxu0 0.0
    %554 = vmatpush1.msra.mxu0 0.0
    %555 = vmatprep.subr.mxu0 0.0
    %556 = vmatpush1.msra.mxu0 0.0
    %557 = vmatprep.subr.mxu0 0.0
    %558 = vmatpush1.msra.mxu0 0.0
    %559 = vmatprep.subr.mxu0 0.0
    %560 = vmatpush1.msra.mxu0 0.0
    %561 = vmatprep.subr.mxu0 0.0
    %562 = vmatpush1.msra.mxu0 0.0
    %563 = vmatprep.subr.mxu0 0.0
    %564 = vmatpush1.msra.mxu0 0.0
    %565 = vmatprep.subr.mxu0 0.0
    %566 = vmatpush1.msra.mxu0 0.0
    %567 = vmatprep.subr.mxu0 0.0
    %568 = vmatpush1.msra.mxu0 0.0
    %569 = vmatprep.subr.mxu0 0.0
    %570 = vmatpush1.msra.mxu0 0.0
    %571 = vmatprep.subr.mxu0 0.0
    %572 = vmatpush1.msra.mxu0 0.0
    %573 = vmatprep.subr.mxu0 0.0
    %574 = vmatpush1.msra.mxu0 0.0
    %575 = vmatprep.subr.mxu0 0.0
    %576 = vmatpush1.msra.mxu0 0.0
    %577 = vmatprep.mubr.f32.mxu0 0.0
    %578 = vmatmul.mubr.f32.gmra.mrb[0].mxu0 %v356
    %v579 = vpop.f32.mrb[0].mxu0
    %v580 = vadd.f32 %v475, %v579
    %v581 = vpop.f32.mrb[0].mxu0
    %582 = vmatprep.mubr.f32.mxu0 0.0
    %583 = vmatmul.mubr.f32.gmra.mrb[0].mxu0 %v355
    %v584 = vpop.f32.mrb[0].mxu0
    %v585 = vadd.f32 %v480, %v584
    %v586 = vpop.f32.mrb[0].mxu0
    %587 = vmatprep.mubr.f32.mxu0 0.0
    %588 = vmatmul.mubr.f32.gmra.mrb[0].mxu0 %v354
    %v589 = vpop.f32.mrb[0].mxu0
    %v590 = vadd.f32 %v485, %v589
    %v591 = vpop.f32.mrb[0].mxu0
    %592 = vmatprep.mubr.f32.mxu0 0.0
    %593 = vmatmul.mubr.f32.gmra.mrb[0].mxu0 %v353
    %v594 = vpop.f32.mrb[0].mxu0
    %v595 = vadd.f32 %v490, %v594
    %v596 = vpop.f32.mrb[0].mxu0
    %597 = vmatprep.mubr.f32.mxu0 0.0
    %598 = vmatmul.mubr.f32.gmra.mrb[0].mxu0 %v352
    %v599 = vpop.f32.mrb[0].mxu0
    %v600 = vadd.f32 %v495, %v599
    %v601 = vpop.f32.mrb[0].mxu0
    %602 = vmatprep.mubr.f32.mxu0 0.0
    %603 = vmatmul.mubr.f32.gmra.mrb[0].mxu0 %v351
    %v604 = vpop.f32.mrb[0].mxu0
    %v605 = vadd.f32 %v500, %v604
    %v606 = vpop.f32.mrb[0].mxu0
    %607 = vmatprep.mubr.f32.mxu0 0.0
    %608 = vmatmul.mubr.f32.gmra.mrb[0].mxu0 %v350
    %v609 = vpop.f32.mrb[0].mxu0
    %v610 = vadd.f32 %v505, %v609
    %v611 = vpop.f32.mrb[0].mxu0
    %612 = vmatprep.mubr.f32.mxu0 0.0
    %613 = vmatmul.mubr.f32.gmra.mrb[0].mxu0 %v349
    %v614 = vpop.f32.mrb[0].mxu0
    %v615 = vadd.f32 %v510, %v614
    %v616 = vpop.f32.mrb[0].mxu0
    %617 = vdwg.mxu0
    %s618 = scalar_lea.vmem [#allocation5], 640
    %v619 = vld [vmem:[%s618] sm:$0xff]
    %v620 = vld [vmem:[%s618 + $0x8] sm:$0xff]
    %v621 = vld [vmem:[%s618 + $0x10] sm:$0xff]
    %v622 = vld [vmem:[%s618 + $0x18] sm:$0xff]
    %v623 = vld [vmem:[%s618 + $0x20] sm:$0xff]
    %v624 = vld [vmem:[%s618 + $0x28] sm:$0xff]
    %v625 = vld [vmem:[%s618 + $0x30] sm:$0xff]
    %v626 = vld [vmem:[%s618 + $0x38] sm:$0xff]
    %v627 = vld [vmem:[%s618 + $0x40] sm:$0xff]
    %v628 = vld [vmem:[%s618 + $0x48] sm:$0xff]
    %v629 = vld [vmem:[%s618 + $0x50] sm:$0xff]
    %v630 = vld [vmem:[%s618 + $0x58] sm:$0xff]
    %v631 = vld [vmem:[%s618 + $0x60] sm:$0xff]
    %v632 = vld [vmem:[%s618 + $0x68] sm:$0xff]
    %v633 = vld [vmem:[%s618 + $0x70] sm:$0xff]
    %v634 = vld [vmem:[%s618 + $0x78] sm:$0xff]
    %635 = vmatprep.subr.mxu0 0.0
    %636 = vmatpush1.msra.mxu0 %v619
    %637 = vmatprep.subr.mxu0 0.0
    %638 = vmatpush1.msra.mxu0 %v620
    %639 = vmatprep.subr.mxu0 0.0
    %640 = vmatpush1.msra.mxu0 %v621
    %641 = vmatprep.subr.mxu0 0.0
    %642 = vmatpush1.msra.mxu0 %v622
    %643 = vmatprep.subr.mxu0 0.0
    %644 = vmatpush1.msra.mxu0 %v623
    %645 = vmatprep.subr.mxu0 0.0
    %646 = vmatpush1.msra.mxu0 %v624
    %647 = vmatprep.subr.mxu0 0.0
    %648 = vmatpush1.msra.mxu0 %v625
    %649 = vmatprep.subr.mxu0 0.0
    %650 = vmatpush1.msra.mxu0 %v626
    %651 = vmatprep.subr.mxu0 0.0
    %652 = vmatpush1.msra.mxu0 %v627
    %653 = vmatprep.subr.mxu0 0.0
    %654 = vmatpush1.msra.mxu0 %v628
    %655 = vmatprep.subr.mxu0 0.0
    %656 = vmatpush1.msra.mxu0 %v629
    %657 = vmatprep.subr.mxu0 0.0
    %658 = vmatpush1.msra.mxu0 %v630
    %659 = vmatprep.subr.mxu0 0.0
    %660 = vmatpush1.msra.mxu0 %v631
    %661 = vmatprep.subr.mxu0 0.0
    %662 = vmatpush1.msra.mxu0 %v632
    %663 = vmatprep.subr.mxu0 0.0
    %664 = vmatpush1.msra.mxu0 %v633
    %665 = vmatprep.subr.mxu0 0.0
    %666 = vmatpush1.msra.mxu0 %v634
    %667 = vmatprep.subr.mxu0 0.0
    %668 = vmatpush1.msra.mxu0 0.0
    %669 = vmatprep.subr.mxu0 0.0
    %670 = vmatpush1.msra.mxu0 0.0
    %671 = vmatprep.subr.mxu0 0.0
    %672 = vmatpush1.msra.mxu0 0.0
    %673 = vmatprep.subr.mxu0 0.0
    %674 = vmatpush1.msra.mxu0 0.0
    %675 = vmatprep.subr.mxu0 0.0
    %676 = vmatpush1.msra.mxu0 0.0
    %677 = vmatprep.subr.mxu0 0.0
    %678 = vmatpush1.msra.mxu0 0.0
    %679 = vmatprep.subr.mxu0 0.0
    %680 = vmatpush1.msra.mxu0 0.0
    %681 = vmatprep.subr.mxu0 0.0
    %682 = vmatpush1.msra.mxu0 0.0
    %683 = vmatprep.subr.mxu0 0.0
    %684 = vmatpush1.msra.mxu0 0.0
    %685 = vmatprep.subr.mxu0 0.0
    %686 = vmatpush1.msra.mxu0 0.0
    %687 = vmatprep.subr.mxu0 0.0
    %688 = vmatpush1.msra.mxu0 0.0
    %689 = vmatprep.subr.mxu0 0.0
    %690 = vmatpush1.msra.mxu0 0.0
    %691 = vmatprep.subr.mxu0 0.0
    %692 = vmatpush1.msra.mxu0 0.0
    %693 = vmatprep.subr.mxu0 0.0
    %694 = vmatpush1.msra.mxu0 0.0
    %695 = vmatprep.subr.mxu0 0.0
    %696 = vmatpush1.msra.mxu0 0.0
    %697 = vmatprep.subr.mxu0 0.0
    %698 = vmatpush1.msra.mxu0 0.0
    %699 = vmatprep.mubr.f32.mxu0 0.0
    %700 = vmatmul.mubr.f32.gmra.mrb[0].mxu0 %v372
    %v701 = vpop.f32.mrb[0].mxu0
    %v702 = vadd.f32 0.0, %v701
    %v703 = vpop.f32.mrb[0].mxu0
    %704 = vmatprep.mubr.f32.mxu0 0.0
    %705 = vmatmul.mubr.f32.gmra.mrb[0].mxu0 %v371
    %v706 = vpop.f32.mrb[0].mxu0
    %v707 = vadd.f32 0.0, %v706
    %v708 = vpop.f32.mrb[0].mxu0
    %709 = vmatprep.mubr.f32.mxu0 0.0
    %710 = vmatmul.mubr.f32.gmra.mrb[0].mxu0 %v370
    %v711 = vpop.f32.mrb[0].mxu0
    %v712 = vadd.f32 0.0, %v711
    %v713 = vpop.f32.mrb[0].mxu0
    %714 = vmatprep.mubr.f32.mxu0 0.0
    %715 = vmatmul.mubr.f32.gmra.mrb[0].mxu0 %v369
    %v716 = vpop.f32.mrb[0].mxu0
    %v717 = vadd.f32 0.0, %v716
    %v718 = vpop.f32.mrb[0].mxu0
    %719 = vmatprep.mubr.f32.mxu0 0.0
    %720 = vmatmul.mubr.f32.gmra.mrb[0].mxu0 %v368
    %v721 = vpop.f32.mrb[0].mxu0
    %v722 = vadd.f32 0.0, %v721
    %v723 = vpop.f32.mrb[0].mxu0
    %724 = vmatprep.mubr.f32.mxu0 0.0
    %725 = vmatmul.mubr.f32.gmra.mrb[0].mxu0 %v367
    %v726 = vpop.f32.mrb[0].mxu0
    %v727 = vadd.f32 0.0, %v726
    %v728 = vpop.f32.mrb[0].mxu0
    %729 = vmatprep.mubr.f32.mxu0 0.0
    %730 = vmatmul.mubr.f32.gmra.mrb[0].mxu0 %v366
    %v731 = vpop.f32.mrb[0].mxu0
    %v732 = vadd.f32 0.0, %v731
    %v733 = vpop.f32.mrb[0].mxu0
    %734 = vmatprep.mubr.f32.mxu0 0.0
    %735 = vmatmul.mubr.f32.gmra.mrb[0].mxu0 %v373
    %v736 = vpop.f32.mrb[0].mxu0
    %v737 = vadd.f32 0.0, %v736
    %v738 = vpop.f32.mrb[0].mxu0
    %739 = vdwg.mxu0
    %v740 = vadd.f32 %v580, %v702
    %v741 = vadd.f32 %v585, %v707
    %v742 = vadd.f32 %v590, %v712
    %v743 = vadd.f32 %v595, %v717
    %v744 = vadd.f32 %v600, %v722
    %v745 = vadd.f32 %v605, %v727
    %v746 = vadd.f32 %v610, %v732
    %v747 = vadd.f32 %v615, %v737
    %v748 = vld [vmem:[#allocation7 + $0x2] sm:$0x1]
    %v749 = vlaneseq
    %v750 = vshrl.u32 %v749, 7
    %v751 = vsub.s32 0, %v750
    %v752 = vrot.slane %v748, %v751
    %v753 = vmul.f32 %v740, %v752
    %v754 = vmul.f32 %v741, %v752
    %v755 = vmul.f32 %v742, %v752
    %v756 = vmul.f32 %v743, %v752
    %v757 = vmul.f32 %v744, %v752
    %v758 = vmul.f32 %v745, %v752
    %v759 = vmul.f32 %v746, %v752
    %v760 = vmul.f32 %v747, %v752
    %v761 = vld [vmem:[#allocation7 + $0x4] sm:$0x1]
    %v762 = vlaneseq
    %v763 = vshrl.u32 %v762, 7
    %v764 = vsub.s32 0, %v763
    %v765 = vrot.slane %v761, %v764
    %v766 = vadd.f32 %v753, %v765
    %v767 = vadd.f32 %v754, %v765
    %v768 = vadd.f32 %v755, %v765
    %v769 = vadd.f32 %v756, %v765
    %v770 = vadd.f32 %v757, %v765
    %v771 = vadd.f32 %v758, %v765
    %v772 = vadd.f32 %v759, %v765
    %v773 = vadd.f32 %v760, %v765
    %v774 = vmax.f32 %v766, 0.0
    %v775 = vmax.f32 %v767, 0.0
    %v776 = vmax.f32 %v768, 0.0
    %v777 = vmax.f32 %v769, 0.0
    %v778 = vmax.f32 %v770, 0.0
    %v779 = vmax.f32 %v771, 0.0
    %v780 = vmax.f32 %v772, 0.0
    %v781 = vmax.f32 %v773, 0.0
    %v782 = vsel %vm161, %v774, 0.0
    %v783 = vsel %vm162, %v775, 0.0
    %v784 = vsel %vm163, %v776, 0.0
    %v785 = vsel %vm164, %v777, 0.0
    %v786 = vsel %vm165, %v778, 0.0
    %v787 = vsel %vm166, %v779, 0.0
    %v788 = vsel %vm167, %v780, 0.0
    %v789 = vsel %vm168, %v781, 0.0
    %v790 = vrot.slane %v782, 7
    %v791 = vrot.slane %v783, 7
    %v792 = vrot.slane %v784, 7
    %v793 = vrot.slane %v785, 7
    %v794 = vrot.slane %v786, 7
    %v795 = vrot.slane %v787, 7
    %v796 = vrot.slane %v788, 7
    %v797 = vrot.slane %v789, 7
    %v798 = vsel %vm348, %v796, %v797
    %v799 = vsel %vm348, %v795, %v796
    %v800 = vsel %vm348, %v794, %v795
    %v801 = vsel %vm348, %v793, %v794
    %v802 = vsel %vm348, %v792, %v793
    %v803 = vsel %vm348, %v791, %v792
    %v804 = vsel %vm348, %v790, %v791
    %v805 = vsel %vm348, %v797, %v790
    %v806 = vrot.slane %v782, 1
    %v807 = vrot.slane %v783, 1
    %v808 = vrot.slane %v784, 1
    %v809 = vrot.slane %v785, 1
    %v810 = vrot.slane %v786, 1
    %v811 = vrot.slane %v787, 1
    %v812 = vrot.slane %v788, 1
    %v813 = vrot.slane %v789, 1
    %v814 = vsel %vm365, %v812, %v813
    %v815 = vsel %vm365, %v811, %v812
    %v816 = vsel %vm365, %v810, %v811
    %v817 = vsel %vm365, %v809, %v810
    %v818 = vsel %vm365, %v808, %v809
    %v819 = vsel %vm365, %v807, %v808
    %v820 = vsel %vm365, %v806, %v807
    %v821 = vsel %vm365, %v813, %v806
    %s822 = scalar_lea.vmem [#allocation5], 768
    %v823 = vld [vmem:[%s822] sm:$0xff]
    %v824 = vld [vmem:[%s822 + $0x8] sm:$0xff]
    %v825 = vld [vmem:[%s822 + $0x10] sm:$0xff]
    %v826 = vld [vmem:[%s822 + $0x18] sm:$0xff]
    %v827 = vld [vmem:[%s822 + $0x20] sm:$0xff]
    %v828 = vld [vmem:[%s822 + $0x28] sm:$0xff]
    %v829 = vld [vmem:[%s822 + $0x30] sm:$0xff]
    %v830 = vld [vmem:[%s822 + $0x38] sm:$0xff]
    %v831 = vld [vmem:[%s822 + $0x40] sm:$0xff]
    %v832 = vld [vmem:[%s822 + $0x48] sm:$0xff]
    %v833 = vld [vmem:[%s822 + $0x50] sm:$0xff]
    %v834 = vld [vmem:[%s822 + $0x58] sm:$0xff]
    %v835 = vld [vmem:[%s822 + $0x60] sm:$0xff]
    %v836 = vld [vmem:[%s822 + $0x68] sm:$0xff]
    %v837 = vld [vmem:[%s822 + $0x70] sm:$0xff]
    %v838 = vld [vmem:[%s822 + $0x78] sm:$0xff]
    %s839 = scalar_lea.vmem [#allocation5], 896
    %v840 = vld [vmem:[%s839] sm:$0xff]
    %v841 = vld [vmem:[%s839 + $0x8] sm:$0xff]
    %v842 = vld [vmem:[%s839 + $0x10] sm:$0xff]
    %v843 = vld [vmem:[%s839 + $0x18] sm:$0xff]
    %v844 = vld [vmem:[%s839 + $0x20] sm:$0xff]
    %v845 = vld [vmem:[%s839 + $0x28] sm:$0xff]
    %v846 = vld [vmem:[%s839 + $0x30] sm:$0xff]
    %v847 = vld [vmem:[%s839 + $0x38] sm:$0xff]
    %v848 = vld [vmem:[%s839 + $0x40] sm:$0xff]
    %v849 = vld [vmem:[%s839 + $0x48] sm:$0xff]
    %v850 = vld [vmem:[%s839 + $0x50] sm:$0xff]
    %v851 = vld [vmem:[%s839 + $0x58] sm:$0xff]
    %v852 = vld [vmem:[%s839 + $0x60] sm:$0xff]
    %v853 = vld [vmem:[%s839 + $0x68] sm:$0xff]
    %v854 = vld [vmem:[%s839 + $0x70] sm:$0xff]
    %v855 = vld [vmem:[%s839 + $0x78] sm:$0xff]
    %856 = vmatprep.subr.mxu0 0.0
    %857 = vmatpush1.msra.mxu0 %v840
    %858 = vmatprep.subr.mxu0 0.0
    %859 = vmatpush1.msra.mxu0 %v841
    %860 = vmatprep.subr.mxu0 0.0
    %861 = vmatpush1.msra.mxu0 %v842
    %862 = vmatprep.subr.mxu0 0.0
    %863 = vmatpush1.msra.mxu0 %v843
    %864 = vmatprep.subr.mxu0 0.0
    %865 = vmatpush1.msra.mxu0 %v844
    %866 = vmatprep.subr.mxu0 0.0
    %867 = vmatpush1.msra.mxu0 %v845
    %868 = vmatprep.subr.mxu0 0.0
    %869 = vmatpush1.msra.mxu0 %v846
    %870 = vmatprep.subr.mxu0 0.0
    %871 = vmatpush1.msra.mxu0 %v847
    %872 = vmatprep.subr.mxu0 0.0
    %873 = vmatpush1.msra.mxu0 %v848
    %874 = vmatprep.subr.mxu0 0.0
    %875 = vmatpush1.msra.mxu0 %v849
    %876 = vmatprep.subr.mxu0 0.0
    %877 = vmatpush1.msra.mxu0 %v850
    %878 = vmatprep.subr.mxu0 0.0
    %879 = vmatpush1.msra.mxu0 %v851
    %880 = vmatprep.subr.mxu0 0.0
    %881 = vmatpush1.msra.mxu0 %v852
    %882 = vmatprep.subr.mxu0 0.0
    %883 = vmatpush1.msra.mxu0 %v853
    %884 = vmatprep.subr.mxu0 0.0
    %885 = vmatpush1.msra.mxu0 %v854
    %886 = vmatprep.subr.mxu0 0.0
    %887 = vmatpush1.msra.mxu0 %v855
    %888 = vmatprep.subr.mxu0 0.0
    %889 = vmatpush1.msra.mxu0 0.0
    %890 = vmatprep.subr.mxu0 0.0
    %891 = vmatpush1.msra.mxu0 0.0
    %892 = vmatprep.subr.mxu0 0.0
    %893 = vmatpush1.msra.mxu0 0.0
    %894 = vmatprep.subr.mxu0 0.0
    %895 = vmatpush1.msra.mxu0 0.0
    %896 = vmatprep.subr.mxu0 0.0
    %897 = vmatpush1.msra.mxu0 0.0
    %898 = vmatprep.subr.mxu0 0.0
    %899 = vmatpush1.msra.mxu0 0.0
    %900 = vmatprep.subr.mxu0 0.0
    %901 = vmatpush1.msra.mxu0 0.0
    %902 = vmatprep.subr.mxu0 0.0
    %903 = vmatpush1.msra.mxu0 0.0
    %904 = vmatprep.subr.mxu0 0.0
    %905 = vmatpush1.msra.mxu0 0.0
    %906 = vmatprep.subr.mxu0 0.0
    %907 = vmatpush1.msra.mxu0 0.0
    %908 = vmatprep.subr.mxu0 0.0
    %909 = vmatpush1.msra.mxu0 0.0
    %910 = vmatprep.subr.mxu0 0.0
    %911 = vmatpush1.msra.mxu0 0.0
    %912 = vmatprep.subr.mxu0 0.0
    %913 = vmatpush1.msra.mxu0 0.0
    %914 = vmatprep.subr.mxu0 0.0
    %915 = vmatpush1.msra.mxu0 0.0
    %916 = vmatprep.subr.mxu0 0.0
    %917 = vmatpush1.msra.mxu0 0.0
    %918 = vmatprep.subr.mxu0 0.0
    %919 = vmatpush1.msra.mxu0 0.0
    %920 = vmatprep.mubr.f32.mxu0 0.0
    %921 = vmatmul.mubr.f32.gmra.mrb[0].mxu0 %v782
    %v922 = vpop.f32.mrb[0].mxu0
    %v923 = vadd.f32 0.0, %v922
    %v924 = vpop.f32.mrb[0].mxu0
    %925 = vmatprep.mubr.f32.mxu0 0.0
    %926 = vmatmul.mubr.f32.gmra.mrb[0].mxu0 %v783
    %v927 = vpop.f32.mrb[0].mxu0
    %v928 = vadd.f32 0.0, %v927
    %v929 = vpop.f32.mrb[0].mxu0
    %930 = vmatprep.mubr.f32.mxu0 0.0
    %931 = vmatmul.mubr.f32.gmra.mrb[0].mxu0 %v784
    %v932 = vpop.f32.mrb[0].mxu0
    %v933 = vadd.f32 0.0, %v932
    %v934 = vpop.f32.mrb[0].mxu0
    %935 = vmatprep.mubr.f32.mxu0 0.0
    %936 = vmatmul.mubr.f32.gmra.mrb[0].mxu0 %v785
    %v937 = vpop.f32.mrb[0].mxu0
    %v938 = vadd.f32 0.0, %v937
    %v939 = vpop.f32.mrb[0].mxu0
    %940 = vmatprep.mubr.f32.mxu0 0.0
    %941 = vmatmul.mubr.f32.gmra.mrb[0].mxu0 %v786
    %v942 = vpop.f32.mrb[0].mxu0
    %v943 = vadd.f32 0.0, %v942
    %v944 = vpop.f32.mrb[0].mxu0
    %945 = vmatprep.mubr.f32.mxu0 0.0
    %946 = vmatmul.mubr.f32.gmra.mrb[0].mxu0 %v787
    %v947 = vpop.f32.mrb[0].mxu0
    %v948 = vadd.f32 0.0, %v947
    %v949 = vpop.f32.mrb[0].mxu0
    %950 = vmatprep.mubr.f32.mxu0 0.0
    %951 = vmatmul.mubr.f32.gmra.mrb[0].mxu0 %v788
    %v952 = vpop.f32.mrb[0].mxu0
    %v953 = vadd.f32 0.0, %v952
    %v954 = vpop.f32.mrb[0].mxu0
    %955 = vmatprep.mubr.f32.mxu0 0.0
    %956 = vmatmul.mubr.f32.gmra.mrb[0].mxu0 %v789
    %v957 = vpop.f32.mrb[0].mxu0
    %v958 = vadd.f32 0.0, %v957
    %v959 = vpop.f32.mrb[0].mxu0
    %960 = vdwg.mxu0
    %961 = vmatprep.subr.mxu0 0.0
    %962 = vmatpush1.msra.mxu0 %v823
    %963 = vmatprep.subr.mxu0 0.0
    %964 = vmatpush1.msra.mxu0 %v824
    %965 = vmatprep.subr.mxu0 0.0
    %966 = vmatpush1.msra.mxu0 %v825
    %967 = vmatprep.subr.mxu0 0.0
    %968 = vmatpush1.msra.mxu0 %v826
    %969 = vmatprep.subr.mxu0 0.0
    %970 = vmatpush1.msra.mxu0 %v827
    %971 = vmatprep.subr.mxu0 0.0
    %972 = vmatpush1.msra.mxu0 %v828
    %973 = vmatprep.subr.mxu0 0.0
    %974 = vmatpush1.msra.mxu0 %v829
    %975 = vmatprep.subr.mxu0 0.0
    %976 = vmatpush1.msra.mxu0 %v830
    %977 = vmatprep.subr.mxu0 0.0
    %978 = vmatpush1.msra.mxu0 %v831
    %979 = vmatprep.subr.mxu0 0.0
    %980 = vmatpush1.msra.mxu0 %v832
    %981 = vmatprep.subr.mxu0 0.0
    %982 = vmatpush1.msra.mxu0 %v833
    %983 = vmatprep.subr.mxu0 0.0
    %984 = vmatpush1.msra.mxu0 %v834
    %985 = vmatprep.subr.mxu0 0.0
    %986 = vmatpush1.msra.mxu0 %v835
    %987 = vmatprep.subr.mxu0 0.0
    %988 = vmatpush1.msra.mxu0 %v836
    %989 = vmatprep.subr.mxu0 0.0
    %990 = vmatpush1.msra.mxu0 %v837
    %991 = vmatprep.subr.mxu0 0.0
    %992 = vmatpush1.msra.mxu0 %v838
    %993 = vmatprep.subr.mxu0 0.0
    %994 = vmatpush1.msra.mxu0 0.0
    %995 = vmatprep.subr.mxu0 0.0
    %996 = vmatpush1.msra.mxu0 0.0
    %997 = vmatprep.subr.mxu0 0.0
    %998 = vmatpush1.msra.mxu0 0.0
    %999 = vmatprep.subr.mxu0 0.0
    %1000 = vmatpush1.msra.mxu0 0.0
    %1001 = vmatprep.subr.mxu0 0.0
    %1002 = vmatpush1.msra.mxu0 0.0
    %1003 = vmatprep.subr.mxu0 0.0
    %1004 = vmatpush1.msra.mxu0 0.0
    %1005 = vmatprep.subr.mxu0 0.0
    %1006 = vmatpush1.msra.mxu0 0.0
    %1007 = vmatprep.subr.mxu0 0.0
    %1008 = vmatpush1.msra.mxu0 0.0
    %1009 = vmatprep.subr.mxu0 0.0
    %1010 = vmatpush1.msra.mxu0 0.0
    %1011 = vmatprep.subr.mxu0 0.0
    %1012 = vmatpush1.msra.mxu0 0.0
    %1013 = vmatprep.subr.mxu0 0.0
    %1014 = vmatpush1.msra.mxu0 0.0
    %1015 = vmatprep.subr.mxu0 0.0
    %1016 = vmatpush1.msra.mxu0 0.0
    %1017 = vmatprep.subr.mxu0 0.0
    %1018 = vmatpush1.msra.mxu0 0.0
    %1019 = vmatprep.subr.mxu0 0.0
    %1020 = vmatpush1.msra.mxu0 0.0
    %1021 = vmatprep.subr.mxu0 0.0
    %1022 = vmatpush1.msra.mxu0 0.0
    %1023 = vmatprep.subr.mxu0 0.0
    %1024 = vmatpush1.msra.mxu0 0.0
    %1025 = vmatprep.mubr.f32.mxu0 0.0
    %1026 = vmatmul.mubr.f32.gmra.mrb[0].mxu0 %v805
    %v1027 = vpop.f32.mrb[0].mxu0
    %v1028 = vadd.f32 %v923, %v1027
    %v1029 = vpop.f32.mrb[0].mxu0
    %1030 = vmatprep.mubr.f32.mxu0 0.0
    %1031 = vmatmul.mubr.f32.gmra.mrb[0].mxu0 %v804
    %v1032 = vpop.f32.mrb[0].mxu0
    %v1033 = vadd.f32 %v928, %v1032
    %v1034 = vpop.f32.mrb[0].mxu0
    %1035 = vmatprep.mubr.f32.mxu0 0.0
    %1036 = vmatmul.mubr.f32.gmra.mrb[0].mxu0 %v803
    %v1037 = vpop.f32.mrb[0].mxu0
    %v1038 = vadd.f32 %v933, %v1037
    %v1039 = vpop.f32.mrb[0].mxu0
    %1040 = vmatprep.mubr.f32.mxu0 0.0
    %1041 = vmatmul.mubr.f32.gmra.mrb[0].mxu0 %v802
    %v1042 = vpop.f32.mrb[0].mxu0
    %v1043 = vadd.f32 %v938, %v1042
    %v1044 = vpop.f32.mrb[0].mxu0
    %1045 = vmatprep.mubr.f32.mxu0 0.0
    %1046 = vmatmul.mubr.f32.gmra.mrb[0].mxu0 %v801
    %v1047 = vpop.f32.mrb[0].mxu0
    %v1048 = vadd.f32 %v943, %v1047
    %v1049 = vpop.f32.mrb[0].mxu0
    %1050 = vmatprep.mubr.f32.mxu0 0.0
    %1051 = vmatmul.mubr.f32.gmra.mrb[0].mxu0 %v800
    %v1052 = vpop.f32.mrb[0].mxu0
    %v1053 = vadd.f32 %v948, %v1052
    %v1054 = vpop.f32.mrb[0].mxu0
    %1055 = vmatprep.mubr.f32.mxu0 0.0
    %1056 = vmatmul.mubr.f32.gmra.mrb[0].mxu0 %v799
    %v1057 = vpop.f32.mrb[0].mxu0
    %v1058 = vadd.f32 %v953, %v1057
    %v1059 = vpop.f32.mrb[0].mxu0
    %1060 = vmatprep.mubr.f32.mxu0 0.0
    %1061 = vmatmul.mubr.f32.gmra.mrb[0].mxu0 %v798
    %v1062 = vpop.f32.mrb[0].mxu0
    %v1063 = vadd.f32 %v958, %v1062
    %v1064 = vpop.f32.mrb[0].mxu0
    %1065 = vdwg.mxu0
    %s1066 = scalar_lea.vmem [#allocation5], 1024
    %v1067 = vld [vmem:[%s1066] sm:$0xff]
    %v1068 = vld [vmem:[%s1066 + $0x8] sm:$0xff]
    %v1069 = vld [vmem:[%s1066 + $0x10] sm:$0xff]
    %v1070 = vld [vmem:[%s1066 + $0x18] sm:$0xff]
    %v1071 = vld [vmem:[%s1066 + $0x20] sm:$0xff]
    %v1072 = vld [vmem:[%s1066 + $0x28] sm:$0xff]
    %v1073 = vld [vmem:[%s1066 + $0x30] sm:$0xff]
    %v1074 = vld [vmem:[%s1066 + $0x38] sm:$0xff]
    %v1075 = vld [vmem:[%s1066 + $0x40] sm:$0xff]
    %v1076 = vld [vmem:[%s1066 + $0x48] sm:$0xff]
    %v1077 = vld [vmem:[%s1066 + $0x50] sm:$0xff]
    %v1078 = vld [vmem:[%s1066 + $0x58] sm:$0xff]
    %v1079 = vld [vmem:[%s1066 + $0x60] sm:$0xff]
    %v1080 = vld [vmem:[%s1066 + $0x68] sm:$0xff]
    %v1081 = vld [vmem:[%s1066 + $0x70] sm:$0xff]
    %v1082 = vld [vmem:[%s1066 + $0x78] sm:$0xff]
    %1083 = vmatprep.subr.mxu0 0.0
    %1084 = vmatpush1.msra.mxu0 %v1067
    %1085 = vmatprep.subr.mxu0 0.0
    %1086 = vmatpush1.msra.mxu0 %v1068
    %1087 = vmatprep.subr.mxu0 0.0
    %1088 = vmatpush1.msra.mxu0 %v1069
    %1089 = vmatprep.subr.mxu0 0.0
    %1090 = vmatpush1.msra.mxu0 %v1070
    %1091 = vmatprep.subr.mxu0 0.0
    %1092 = vmatpush1.msra.mxu0 %v1071
    %1093 = vmatprep.subr.mxu0 0.0
    %1094 = vmatpush1.msra.mxu0 %v1072
    %1095 = vmatprep.subr.mxu0 0.0
    %1096 = vmatpush1.msra.mxu0 %v1073
    %1097 = vmatprep.subr.mxu0 0.0
    %1098 = vmatpush1.msra.mxu0 %v1074
    %1099 = vmatprep.subr.mxu0 0.0
    %1100 = vmatpush1.msra.mxu0 %v1075
    %1101 = vmatprep.subr.mxu0 0.0
    %1102 = vmatpush1.msra.mxu0 %v1076
    %1103 = vmatprep.subr.mxu0 0.0
    %1104 = vmatpush1.msra.mxu0 %v1077
    %1105 = vmatprep.subr.mxu0 0.0
    %1106 = vmatpush1.msra.mxu0 %v1078
    %1107 = vmatprep.subr.mxu0 0.0
    %1108 = vmatpush1.msra.mxu0 %v1079
    %1109 = vmatprep.subr.mxu0 0.0
    %1110 = vmatpush1.msra.mxu0 %v1080
    %1111 = vmatprep.subr.mxu0 0.0
    %1112 = vmatpush1.msra.mxu0 %v1081
    %1113 = vmatprep.subr.mxu0 0.0
    %1114 = vmatpush1.msra.mxu0 %v1082
    %1115 = vmatprep.subr.mxu0 0.0
    %1116 = vmatpush1.msra.mxu0 0.0
    %1117 = vmatprep.subr.mxu0 0.0
    %1118 = vmatpush1.msra.mxu0 0.0
    %1119 = vmatprep.subr.mxu0 0.0
    %1120 = vmatpush1.msra.mxu0 0.0
    %1121 = vmatprep.subr.mxu0 0.0
    %1122 = vmatpush1.msra.mxu0 0.0
    %1123 = vmatprep.subr.mxu0 0.0
    %1124 = vmatpush1.msra.mxu0 0.0
    %1125 = vmatprep.subr.mxu0 0.0
    %1126 = vmatpush1.msra.mxu0 0.0
    %1127 = vmatprep.subr.mxu0 0.0
    %1128 = vmatpush1.msra.mxu0 0.0
    %1129 = vmatprep.subr.mxu0 0.0
    %1130 = vmatpush1.msra.mxu0 0.0
    %1131 = vmatprep.subr.mxu0 0.0
    %1132 = vmatpush1.msra.mxu0 0.0
    %1133 = vmatprep.subr.mxu0 0.0
    %1134 = vmatpush1.msra.mxu0 0.0
    %1135 = vmatprep.subr.mxu0 0.0
    %1136 = vmatpush1.msra.mxu0 0.0
    %1137 = vmatprep.subr.mxu0 0.0
    %1138 = vmatpush1.msra.mxu0 0.0
    %1139 = vmatprep.subr.mxu0 0.0
    %1140 = vmatpush1.msra.mxu0 0.0
    %1141 = vmatprep.subr.mxu0 0.0
    %1142 = vmatpush1.msra.mxu0 0.0
    %1143 = vmatprep.subr.mxu0 0.0
    %1144 = vmatpush1.msra.mxu0 0.0
    %1145 = vmatprep.subr.mxu0 0.0
    %1146 = vmatpush1.msra.mxu0 0.0
    %1147 = vmatprep.mubr.f32.mxu0 0.0
    %1148 = vmatmul.mubr.f32.gmra.mrb[0].mxu0 %v820
    %v1149 = vpop.f32.mrb[0].mxu0
    %v1150 = vadd.f32 0.0, %v1149
    %v1151 = vpop.f32.mrb[0].mxu0
    %1152 = vmatprep.mubr.f32.mxu0 0.0
    %1153 = vmatmul.mubr.f32.gmra.mrb[0].mxu0 %v819
    %v1154 = vpop.f32.mrb[0].mxu0
    %v1155 = vadd.f32 0.0, %v1154
    %v1156 = vpop.f32.mrb[0].mxu0
    %1157 = vmatprep.mubr.f32.mxu0 0.0
    %1158 = vmatmul.mubr.f32.gmra.mrb[0].mxu0 %v818
    %v1159 = vpop.f32.mrb[0].mxu0
    %v1160 = vadd.f32 0.0, %v1159
    %v1161 = vpop.f32.mrb[0].mxu0
    %1162 = vmatprep.mubr.f32.mxu0 0.0
    %1163 = vmatmul.mubr.f32.gmra.mrb[0].mxu0 %v817
    %v1164 = vpop.f32.mrb[0].mxu0
    %v1165 = vadd.f32 0.0, %v1164
    %v1166 = vpop.f32.mrb[0].mxu0
    %1167 = vmatprep.mubr.f32.mxu0 0.0
    %1168 = vmatmul.mubr.f32.gmra.mrb[0].mxu0 %v816
    %v1169 = vpop.f32.mrb[0].mxu0
    %v1170 = vadd.f32 0.0, %v1169
    %v1171 = vpop.f32.mrb[0].mxu0
    %1172 = vmatprep.mubr.f32.mxu0 0.0
    %1173 = vmatmul.mubr.f32.gmra.mrb[0].mxu0 %v815
    %v1174 = vpop.f32.mrb[0].mxu0
    %v1175 = vadd.f32 0.0, %v1174
    %v1176 = vpop.f32.mrb[0].mxu0
    %1177 = vmatprep.mubr.f32.mxu0 0.0
    %1178 = vmatmul.mubr.f32.gmra.mrb[0].mxu0 %v814
    %v1179 = vpop.f32.mrb[0].mxu0
    %v1180 = vadd.f32 0.0, %v1179
    %v1181 = vpop.f32.mrb[0].mxu0
    %1182 = vmatprep.mubr.f32.mxu0 0.0
    %1183 = vmatmul.mubr.f32.gmra.mrb[0].mxu0 %v821
    %v1184 = vpop.f32.mrb[0].mxu0
    %v1185 = vadd.f32 0.0, %v1184
    %v1186 = vpop.f32.mrb[0].mxu0
    %1187 = vdwg.mxu0
    %v1188 = vadd.f32 %v1028, %v1150
    %v1189 = vadd.f32 %v1033, %v1155
    %v1190 = vadd.f32 %v1038, %v1160
    %v1191 = vadd.f32 %v1043, %v1165
    %v1192 = vadd.f32 %v1048, %v1170
    %v1193 = vadd.f32 %v1053, %v1175
    %v1194 = vadd.f32 %v1058, %v1180
    %v1195 = vadd.f32 %v1063, %v1185
    %v1196 = vld [vmem:[#allocation7 + $0x6] sm:$0x1]
    %v1197 = vlaneseq
    %v1198 = vshrl.u32 %v1197, 7
    %v1199 = vsub.s32 0, %v1198
    %v1200 = vrot.slane %v1196, %v1199
    %v1201 = vmul.f32 %v1188, %v1200
    %v1202 = vmul.f32 %v1189, %v1200
    %v1203 = vmul.f32 %v1190, %v1200
    %v1204 = vmul.f32 %v1191, %v1200
    %v1205 = vmul.f32 %v1192, %v1200
    %v1206 = vmul.f32 %v1193, %v1200
    %v1207 = vmul.f32 %v1194, %v1200
    %v1208 = vmul.f32 %v1195, %v1200
    %v1209 = vld [vmem:[#allocation7 + $0x8] sm:$0x1]
    %v1210 = vlaneseq
    %v1211 = vshrl.u32 %v1210, 7
    %v1212 = vsub.s32 0, %v1211
    %v1213 = vrot.slane %v1209, %v1212
    %v1214 = vadd.f32 %v1201, %v1213
    %v1215 = vadd.f32 %v1202, %v1213
    %v1216 = vadd.f32 %v1203, %v1213
    %v1217 = vadd.f32 %v1204, %v1213
    %v1218 = vadd.f32 %v1205, %v1213
    %v1219 = vadd.f32 %v1206, %v1213
    %v1220 = vadd.f32 %v1207, %v1213
    %v1221 = vadd.f32 %v1208, %v1213
    %v1222 = vadd.f32 %v1214, %v332
    %v1223 = vadd.f32 %v1215, %v333
    %v1224 = vadd.f32 %v1216, %v334
    %v1225 = vadd.f32 %v1217, %v335
    %v1226 = vadd.f32 %v1218, %v336
    %v1227 = vadd.f32 %v1219, %v337
    %v1228 = vadd.f32 %v1220, %v338
    %v1229 = vadd.f32 %v1221, %v339
    %v1230 = vmax.f32 %v1222, 0.0
    %v1231 = vmax.f32 %v1223, 0.0
    %v1232 = vmax.f32 %v1224, 0.0
    %v1233 = vmax.f32 %v1225, 0.0
    %v1234 = vmax.f32 %v1226, 0.0
    %v1235 = vmax.f32 %v1227, 0.0
    %v1236 = vmax.f32 %v1228, 0.0
    %v1237 = vmax.f32 %v1229, 0.0
    %v1238 = vsel %vm161, %v1230, 0.0
    %v1239 = vsel %vm162, %v1231, 0.0
    %v1240 = vsel %vm163, %v1232, 0.0
    %v1241 = vsel %vm164, %v1233, 0.0
    %v1242 = vsel %vm165, %v1234, 0.0
    %v1243 = vsel %vm166, %v1235, 0.0
    %v1244 = vsel %vm167, %v1236, 0.0
    %v1245 = vsel %vm168, %v1237, 0.0
    %v1246 = vrot.slane %v1238, 7
    %v1247 = vrot.slane %v1239, 7
    %v1248 = vrot.slane %v1240, 7
    %v1249 = vrot.slane %v1241, 7
    %v1250 = vrot.slane %v1242, 7
    %v1251 = vrot.slane %v1243, 7
    %v1252 = vrot.slane %v1244, 7
    %v1253 = vrot.slane %v1245, 7
    %v1254 = vsel %vm348, %v1252, %v1253
    %v1255 = vsel %vm348, %v1251, %v1252
    %v1256 = vsel %vm348, %v1250, %v1251
    %v1257 = vsel %vm348, %v1249, %v1250
    %v1258 = vsel %vm348, %v1248, %v1249
    %v1259 = vsel %vm348, %v1247, %v1248
    %v1260 = vsel %vm348, %v1246, %v1247
    %v1261 = vsel %vm348, %v1253, %v1246
    %v1262 = vrot.slane %v1238, 1
    %v1263 = vrot.slane %v1239, 1
    %v1264 = vrot.slane %v1240, 1
    %v1265 = vrot.slane %v1241, 1
    %v1266 = vrot.slane %v1242, 1
    %v1267 = vrot.slane %v1243, 1
    %v1268 = vrot.slane %v1244, 1
    %v1269 = vrot.slane %v1245, 1
    %v1270 = vsel %vm365, %v1268, %v1269
    %v1271 = vsel %vm365, %v1267, %v1268
    %v1272 = vsel %vm365, %v1266, %v1267
    %v1273 = vsel %vm365, %v1265, %v1266
    %v1274 = vsel %vm365, %v1264, %v1265
    %v1275 = vsel %vm365, %v1263, %v1264
    %v1276 = vsel %vm365, %v1262, %v1263
    %v1277 = vsel %vm365, %v1269, %v1262
    %s1278 = scalar_lea.vmem [#allocation5], 1152
    %v1279 = vld [vmem:[%s1278] sm:$0xff]
    %v1280 = vld [vmem:[%s1278 + $0x8] sm:$0xff]
    %v1281 = vld [vmem:[%s1278 + $0x10] sm:$0xff]
    %v1282 = vld [vmem:[%s1278 + $0x18] sm:$0xff]
    %v1283 = vld [vmem:[%s1278 + $0x20] sm:$0xff]
    %v1284 = vld [vmem:[%s1278 + $0x28] sm:$0xff]
    %v1285 = vld [vmem:[%s1278 + $0x30] sm:$0xff]
    %v1286 = vld [vmem:[%s1278 + $0x38] sm:$0xff]
    %v1287 = vld [vmem:[%s1278 + $0x40] sm:$0xff]
    %v1288 = vld [vmem:[%s1278 + $0x48] sm:$0xff]
    %v1289 = vld [vmem:[%s1278 + $0x50] sm:$0xff]
    %v1290 = vld [vmem:[%s1278 + $0x58] sm:$0xff]
    %v1291 = vld [vmem:[%s1278 + $0x60] sm:$0xff]
    %v1292 = vld [vmem:[%s1278 + $0x68] sm:$0xff]
    %v1293 = vld [vmem:[%s1278 + $0x70] sm:$0xff]
    %v1294 = vld [vmem:[%s1278 + $0x78] sm:$0xff]
    %s1295 = scalar_lea.vmem [#allocation5], 1280
    %v1296 = vld [vmem:[%s1295] sm:$0xff]
    %v1297 = vld [vmem:[%s1295 + $0x8] sm:$0xff]
    %v1298 = vld [vmem:[%s1295 + $0x10] sm:$0xff]
    %v1299 = vld [vmem:[%s1295 + $0x18] sm:$0xff]
    %v1300 = vld [vmem:[%s1295 + $0x20] sm:$0xff]
    %v1301 = vld [vmem:[%s1295 + $0x28] sm:$0xff]
    %v1302 = vld [vmem:[%s1295 + $0x30] sm:$0xff]
    %v1303 = vld [vmem:[%s1295 + $0x38] sm:$0xff]
    %v1304 = vld [vmem:[%s1295 + $0x40] sm:$0xff]
    %v1305 = vld [vmem:[%s1295 + $0x48] sm:$0xff]
    %v1306 = vld [vmem:[%s1295 + $0x50] sm:$0xff]
    %v1307 = vld [vmem:[%s1295 + $0x58] sm:$0xff]
    %v1308 = vld [vmem:[%s1295 + $0x60] sm:$0xff]
    %v1309 = vld [vmem:[%s1295 + $0x68] sm:$0xff]
    %v1310 = vld [vmem:[%s1295 + $0x70] sm:$0xff]
    %v1311 = vld [vmem:[%s1295 + $0x78] sm:$0xff]
    %1312 = vmatprep.subr.mxu0 0.0
    %1313 = vmatpush1.msra.mxu0 %v1296
    %1314 = vmatprep.subr.mxu0 0.0
    %1315 = vmatpush1.msra.mxu0 %v1297
    %1316 = vmatprep.subr.mxu0 0.0
    %1317 = vmatpush1.msra.mxu0 %v1298
    %1318 = vmatprep.subr.mxu0 0.0
    %1319 = vmatpush1.msra.mxu0 %v1299
    %1320 = vmatprep.subr.mxu0 0.0
    %1321 = vmatpush1.msra.mxu0 %v1300
    %1322 = vmatprep.subr.mxu0 0.0
    %1323 = vmatpush1.msra.mxu0 %v1301
    %1324 = vmatprep.subr.mxu0 0.0
    %1325 = vmatpush1.msra.mxu0 %v1302
    %1326 = vmatprep.subr.mxu0 0.0
    %1327 = vmatpush1.msra.mxu0 %v1303
    %1328 = vmatprep.subr.mxu0 0.0
    %1329 = vmatpush1.msra.mxu0 %v1304
    %1330 = vmatprep.subr.mxu0 0.0
    %1331 = vmatpush1.msra.mxu0 %v1305
    %1332 = vmatprep.subr.mxu0 0.0
    %1333 = vmatpush1.msra.mxu0 %v1306
    %1334 = vmatprep.subr.mxu0 0.0
    %1335 = vmatpush1.msra.mxu0 %v1307
    %1336 = vmatprep.subr.mxu0 0.0
    %1337 = vmatpush1.msra.mxu0 %v1308
    %1338 = vmatprep.subr.mxu0 0.0
    %1339 = vmatpush1.msra.mxu0 %v1309
    %1340 = vmatprep.subr.mxu0 0.0
    %1341 = vmatpush1.msra.mxu0 %v1310
    %1342 = vmatprep.subr.mxu0 0.0
    %1343 = vmatpush1.msra.mxu0 %v1311
    %1344 = vmatprep.subr.mxu0 0.0
    %1345 = vmatpush1.msra.mxu0 0.0
    %1346 = vmatprep.subr.mxu0 0.0
    %1347 = vmatpush1.msra.mxu0 0.0
    %1348 = vmatprep.subr.mxu0 0.0
    %1349 = vmatpush1.msra.mxu0 0.0
    %1350 = vmatprep.subr.mxu0 0.0
    %1351 = vmatpush1.msra.mxu0 0.0
    %1352 = vmatprep.subr.mxu0 0.0
    %1353 = vmatpush1.msra.mxu0 0.0
    %1354 = vmatprep.subr.mxu0 0.0
    %1355 = vmatpush1.msra.mxu0 0.0
    %1356 = vmatprep.subr.mxu0 0.0
    %1357 = vmatpush1.msra.mxu0 0.0
    %1358 = vmatprep.subr.mxu0 0.0
    %1359 = vmatpush1.msra.mxu0 0.0
    %1360 = vmatprep.subr.mxu0 0.0
    %1361 = vmatpush1.msra.mxu0 0.0
    %1362 = vmatprep.subr.mxu0 0.0
    %1363 = vmatpush1.msra.mxu0 0.0
    %1364 = vmatprep.subr.mxu0 0.0
    %1365 = vmatpush1.msra.mxu0 0.0
    %1366 = vmatprep.subr.mxu0 0.0
    %1367 = vmatpush1.msra.mxu0 0.0
    %1368 = vmatprep.subr.mxu0 0.0
    %1369 = vmatpush1.msra.mxu0 0.0
    %1370 = vmatprep.subr.mxu0 0.0
    %1371 = vmatpush1.msra.mxu0 0.0
    %1372 = vmatprep.subr.mxu0 0.0
    %1373 = vmatpush1.msra.mxu0 0.0
    %1374 = vmatprep.subr.mxu0 0.0
    %1375 = vmatpush1.msra.mxu0 0.0
    %1376 = vmatprep.mubr.f32.mxu0 0.0
    %1377 = vmatmul.mubr.f32.gmra.mrb[0].mxu0 %v1238
    %v1378 = vpop.f32.mrb[0].mxu0
    %v1379 = vadd.f32 0.0, %v1378
    %v1380 = vpop.f32.mrb[0].mxu0
    %1381 = vmatprep.mubr.f32.mxu0 0.0
    %1382 = vmatmul.mubr.f32.gmra.mrb[0].mxu0 %v1239
    %v1383 = vpop.f32.mrb[0].mxu0
    %v1384 = vadd.f32 0.0, %v1383
    %v1385 = vpop.f32.mrb[0].mxu0
    %1386 = vmatprep.mubr.f32.mxu0 0.0
    %1387 = vmatmul.mubr.f32.gmra.mrb[0].mxu0 %v1240
    %v1388 = vpop.f32.mrb[0].mxu0
    %v1389 = vadd.f32 0.0, %v1388
    %v1390 = vpop.f32.mrb[0].mxu0
    %1391 = vmatprep.mubr.f32.mxu0 0.0
    %1392 = vmatmul.mubr.f32.gmra.mrb[0].mxu0 %v1241
    %v1393 = vpop.f32.mrb[0].mxu0
    %v1394 = vadd.f32 0.0, %v1393
    %v1395 = vpop.f32.mrb[0].mxu0
    %1396 = vmatprep.mubr.f32.mxu0 0.0
    %1397 = vmatmul.mubr.f32.gmra.mrb[0].mxu0 %v1242
    %v1398 = vpop.f32.mrb[0].mxu0
    %v1399 = vadd.f32 0.0, %v1398
    %v1400 = vpop.f32.mrb[0].mxu0
    %1401 = vmatprep.mubr.f32.mxu0 0.0
    %1402 = vmatmul.mubr.f32.gmra.mrb[0].mxu0 %v1243
    %v1403 = vpop.f32.mrb[0].mxu0
    %v1404 = vadd.f32 0.0, %v1403
    %v1405 = vpop.f32.mrb[0].mxu0
    %1406 = vmatprep.mubr.f32.mxu0 0.0
    %1407 = vmatmul.mubr.f32.gmra.mrb[0].mxu0 %v1244
    %v1408 = vpop.f32.mrb[0].mxu0
    %v1409 = vadd.f32 0.0, %v1408
    %v1410 = vpop.f32.mrb[0].mxu0
    %1411 = vmatprep.mubr.f32.mxu0 0.0
    %1412 = vmatmul.mubr.f32.gmra.mrb[0].mxu0 %v1245
    %v1413 = vpop.f32.mrb[0].mxu0
    %v1414 = vadd.f32 0.0, %v1413
    %v1415 = vpop.f32.mrb[0].mxu0
    %1416 = vdwg.mxu0
    %1417 = vmatprep.subr.mxu0 0.0
    %1418 = vmatpush1.msra.mxu0 %v1279
    %1419 = vmatprep.subr.mxu0 0.0
    %1420 = vmatpush1.msra.mxu0 %v1280
    %1421 = vmatprep.subr.mxu0 0.0
    %1422 = vmatpush1.msra.mxu0 %v1281
    %1423 = vmatprep.subr.mxu0 0.0
    %1424 = vmatpush1.msra.mxu0 %v1282
    %1425 = vmatprep.subr.mxu0 0.0
    %1426 = vmatpush1.msra.mxu0 %v1283
    %1427 = vmatprep.subr.mxu0 0.0
    %1428 = vmatpush1.msra.mxu0 %v1284
    %1429 = vmatprep.subr.mxu0 0.0
    %1430 = vmatpush1.msra.mxu0 %v1285
    %1431 = vmatprep.subr.mxu0 0.0
    %1432 = vmatpush1.msra.mxu0 %v1286
    %1433 = vmatprep.subr.mxu0 0.0
    %1434 = vmatpush1.msra.mxu0 %v1287
    %1435 = vmatprep.subr.mxu0 0.0
    %1436 = vmatpush1.msra.mxu0 %v1288
    %1437 = vmatprep.subr.mxu0 0.0
    %1438 = vmatpush1.msra.mxu0 %v1289
    %1439 = vmatprep.subr.mxu0 0.0
    %1440 = vmatpush1.msra.mxu0 %v1290
    %1441 = vmatprep.subr.mxu0 0.0
    %1442 = vmatpush1.msra.mxu0 %v1291
    %1443 = vmatprep.subr.mxu0 0.0
    %1444 = vmatpush1.msra.mxu0 %v1292
    %1445 = vmatprep.subr.mxu0 0.0
    %1446 = vmatpush1.msra.mxu0 %v1293
    %1447 = vmatprep.subr.mxu0 0.0
    %1448 = vmatpush1.msra.mxu0 %v1294
    %1449 = vmatprep.subr.mxu0 0.0
    %1450 = vmatpush1.msra.mxu0 0.0
    %1451 = vmatprep.subr.mxu0 0.0
    %1452 = vmatpush1.msra.mxu0 0.0
    %1453 = vmatprep.subr.mxu0 0.0
    %1454 = vmatpush1.msra.mxu0 0.0
    %1455 = vmatprep.subr.mxu0 0.0
    %1456 = vmatpush1.msra.mxu0 0.0
    %1457 = vmatprep.subr.mxu0 0.0
    %1458 = vmatpush1.msra.mxu0 0.0
    %1459 = vmatprep.subr.mxu0 0.0
    %1460 = vmatpush1.msra.mxu0 0.0
    %1461 = vmatprep.subr.mxu0 0.0
    %1462 = vmatpush1.msra.mxu0 0.0
    %1463 = vmatprep.subr.mxu0 0.0
    %1464 = vmatpush1.msra.mxu0 0.0
    %1465 = vmatprep.subr.mxu0 0.0
    %1466 = vmatpush1.msra.mxu0 0.0
    %1467 = vmatprep.subr.mxu0 0.0
    %1468 = vmatpush1.msra.mxu0 0.0
    %1469 = vmatprep.subr.mxu0 0.0
    %1470 = vmatpush1.msra.mxu0 0.0
    %1471 = vmatprep.subr.mxu0 0.0
    %1472 = vmatpush1.msra.mxu0 0.0
    %1473 = vmatprep.subr.mxu0 0.0
    %1474 = vmatpush1.msra.mxu0 0.0
    %1475 = vmatprep.subr.mxu0 0.0
    %1476 = vmatpush1.msra.mxu0 0.0
    %1477 = vmatprep.subr.mxu0 0.0
    %1478 = vmatpush1.msra.mxu0 0.0
    %1479 = vmatprep.subr.mxu0 0.0
    %1480 = vmatpush1.msra.mxu0 0.0
    %1481 = vmatprep.mubr.f32.mxu0 0.0
    %1482 = vmatmul.mubr.f32.gmra.mrb[0].mxu0 %v1261
    %v1483 = vpop.f32.mrb[0].mxu0
    %v1484 = vadd.f32 %v1379, %v1483
    %v1485 = vpop.f32.mrb[0].mxu0
    %1486 = vmatprep.mubr.f32.mxu0 0.0
    %1487 = vmatmul.mubr.f32.gmra.mrb[0].mxu0 %v1260
    %v1488 = vpop.f32.mrb[0].mxu0
    %v1489 = vadd.f32 %v1384, %v1488
    %v1490 = vpop.f32.mrb[0].mxu0
    %1491 = vmatprep.mubr.f32.mxu0 0.0
    %1492 = vmatmul.mubr.f32.gmra.mrb[0].mxu0 %v1259
    %v1493 = vpop.f32.mrb[0].mxu0
    %v1494 = vadd.f32 %v1389, %v1493
    %v1495 = vpop.f32.mrb[0].mxu0
    %1496 = vmatprep.mubr.f32.mxu0 0.0
    %1497 = vmatmul.mubr.f32.gmra.mrb[0].mxu0 %v1258
    %v1498 = vpop.f32.mrb[0].mxu0
    %v1499 = vadd.f32 %v1394, %v1498
    %v1500 = vpop.f32.mrb[0].mxu0
    %1501 = vmatprep.mubr.f32.mxu0 0.0
    %1502 = vmatmul.mubr.f32.gmra.mrb[0].mxu0 %v1257
    %v1503 = vpop.f32.mrb[0].mxu0
    %v1504 = vadd.f32 %v1399, %v1503
    %v1505 = vpop.f32.mrb[0].mxu0
    %1506 = vmatprep.mubr.f32.mxu0 0.0
    %1507 = vmatmul.mubr.f32.gmra.mrb[0].mxu0 %v1256
    %v1508 = vpop.f32.mrb[0].mxu0
    %v1509 = vadd.f32 %v1404, %v1508
    %v1510 = vpop.f32.mrb[0].mxu0
    %1511 = vmatprep.mubr.f32.mxu0 0.0
    %1512 = vmatmul.mubr.f32.gmra.mrb[0].mxu0 %v1255
    %v1513 = vpop.f32.mrb[0].mxu0
    %v1514 = vadd.f32 %v1409, %v1513
    %v1515 = vpop.f32.mrb[0].mxu0
    %1516 = vmatprep.mubr.f32.mxu0 0.0
    %1517 = vmatmul.mubr.f32.gmra.mrb[0].mxu0 %v1254
    %v1518 = vpop.f32.mrb[0].mxu0
    %v1519 = vadd.f32 %v1414, %v1518
    %v1520 = vpop.f32.mrb[0].mxu0
    %1521 = vdwg.mxu0
    %s1522 = scalar_lea.vmem [#allocation5], 1408
    %v1523 = vld [vmem:[%s1522] sm:$0xff]
    %v1524 = vld [vmem:[%s1522 + $0x8] sm:$0xff]
    %v1525 = vld [vmem:[%s1522 + $0x10] sm:$0xff]
    %v1526 = vld [vmem:[%s1522 + $0x18] sm:$0xff]
    %v1527 = vld [vmem:[%s1522 + $0x20] sm:$0xff]
    %v1528 = vld [vmem:[%s1522 + $0x28] sm:$0xff]
    %v1529 = vld [vmem:[%s1522 + $0x30] sm:$0xff]
    %v1530 = vld [vmem:[%s1522 + $0x38] sm:$0xff]
    %v1531 = vld [vmem:[%s1522 + $0x40] sm:$0xff]
    %v1532 = vld [vmem:[%s1522 + $0x48] sm:$0xff]
    %v1533 = vld [vmem:[%s1522 + $0x50] sm:$0xff]
    %v1534 = vld [vmem:[%s1522 + $0x58] sm:$0xff]
    %v1535 = vld [vmem:[%s1522 + $0x60] sm:$0xff]
    %v1536 = vld [vmem:[%s1522 + $0x68] sm:$0xff]
    %v1537 = vld [vmem:[%s1522 + $0x70] sm:$0xff]
    %v1538 = vld [vmem:[%s1522 + $0x78] sm:$0xff]
    %1539 = vmatprep.subr.mxu0 0.0
    %1540 = vmatpush1.msra.mxu0 %v1523
    %1541 = vmatprep.subr.mxu0 0.0
    %1542 = vmatpush1.msra.mxu0 %v1524
    %1543 = vmatprep.subr.mxu0 0.0
    %1544 = vmatpush1.msra.mxu0 %v1525
    %1545 = vmatprep.subr.mxu0 0.0
    %1546 = vmatpush1.msra.mxu0 %v1526
    %1547 = vmatprep.subr.mxu0 0.0
    %1548 = vmatpush1.msra.mxu0 %v1527
    %1549 = vmatprep.subr.mxu0 0.0
    %1550 = vmatpush1.msra.mxu0 %v1528
    %1551 = vmatprep.subr.mxu0 0.0
    %1552 = vmatpush1.msra.mxu0 %v1529
    %1553 = vmatprep.subr.mxu0 0.0
    %1554 = vmatpush1.msra.mxu0 %v1530
    %1555 = vmatprep.subr.mxu0 0.0
    %1556 = vmatpush1.msra.mxu0 %v1531
    %1557 = vmatprep.subr.mxu0 0.0
    %1558 = vmatpush1.msra.mxu0 %v1532
    %1559 = vmatprep.subr.mxu0 0.0
    %1560 = vmatpush1.msra.mxu0 %v1533
    %1561 = vmatprep.subr.mxu0 0.0
    %1562 = vmatpush1.msra.mxu0 %v1534
    %1563 = vmatprep.subr.mxu0 0.0
    %1564 = vmatpush1.msra.mxu0 %v1535
    %1565 = vmatprep.subr.mxu0 0.0
    %1566 = vmatpush1.msra.mxu0 %v1536
    %1567 = vmatprep.subr.mxu0 0.0
    %1568 = vmatpush1.msra.mxu0 %v1537
    %1569 = vmatprep.subr.mxu0 0.0
    %1570 = vmatpush1.msra.mxu0 %v1538
    %1571 = vmatprep.subr.mxu0 0.0
    %1572 = vmatpush1.msra.mxu0 0.0
    %1573 = vmatprep.subr.mxu0 0.0
    %1574 = vmatpush1.msra.mxu0 0.0
    %1575 = vmatprep.subr.mxu0 0.0
    %1576 = vmatpush1.msra.mxu0 0.0
    %1577 = vmatprep.subr.mxu0 0.0
    %1578 = vmatpush1.msra.mxu0 0.0
    %1579 = vmatprep.subr.mxu0 0.0
    %1580 = vmatpush1.msra.mxu0 0.0
    %1581 = vmatprep.subr.mxu0 0.0
    %1582 = vmatpush1.msra.mxu0 0.0
    %1583 = vmatprep.subr.mxu0 0.0
    %1584 = vmatpush1.msra.mxu0 0.0
    %1585 = vmatprep.subr.mxu0 0.0
    %1586 = vmatpush1.msra.mxu0 0.0
    %1587 = vmatprep.subr.mxu0 0.0
    %1588 = vmatpush1.msra.mxu0 0.0
    %1589 = vmatprep.subr.mxu0 0.0
    %1590 = vmatpush1.msra.mxu0 0.0
    %1591 = vmatprep.subr.mxu0 0.0
    %1592 = vmatpush1.msra.mxu0 0.0
    %1593 = vmatprep.subr.mxu0 0.0
    %1594 = vmatpush1.msra.mxu0 0.0
    %1595 = vmatprep.subr.mxu0 0.0
    %1596 = vmatpush1.msra.mxu0 0.0
    %1597 = vmatprep.subr.mxu0 0.0
    %1598 = vmatpush1.msra.mxu0 0.0
    %1599 = vmatprep.subr.mxu0 0.0
    %1600 = vmatpush1.msra.mxu0 0.0
    %1601 = vmatprep.subr.mxu0 0.0
    %1602 = vmatpush1.msra.mxu0 0.0
    %1603 = vmatprep.mubr.f32.mxu0 0.0
    %1604 = vmatmul.mubr.f32.gmra.mrb[0].mxu0 %v1276
    %v1605 = vpop.f32.mrb[0].mxu0
    %v1606 = vadd.f32 0.0, %v1605
    %v1607 = vpop.f32.mrb[0].mxu0
    %1608 = vmatprep.mubr.f32.mxu0 0.0
    %1609 = vmatmul.mubr.f32.gmra.mrb[0].mxu0 %v1275
    %v1610 = vpop.f32.mrb[0].mxu0
    %v1611 = vadd.f32 0.0, %v1610
    %v1612 = vpop.f32.mrb[0].mxu0
    %1613 = vmatprep.mubr.f32.mxu0 0.0
    %1614 = vmatmul.mubr.f32.gmra.mrb[0].mxu0 %v1274
    %v1615 = vpop.f32.mrb[0].mxu0
    %v1616 = vadd.f32 0.0, %v1615
    %v1617 = vpop.f32.mrb[0].mxu0
    %1618 = vmatprep.mubr.f32.mxu0 0.0
    %1619 = vmatmul.mubr.f32.gmra.mrb[0].mxu0 %v1273
    %v1620 = vpop.f32.mrb[0].mxu0
    %v1621 = vadd.f32 0.0, %v1620
    %v1622 = vpop.f32.mrb[0].mxu0
    %1623 = vmatprep.mubr.f32.mxu0 0.0
    %1624 = vmatmul.mubr.f32.gmra.mrb[0].mxu0 %v1272
    %v1625 = vpop.f32.mrb[0].mxu0
    %v1626 = vadd.f32 0.0, %v1625
    %v1627 = vpop.f32.mrb[0].mxu0
    %1628 = vmatprep.mubr.f32.mxu0 0.0
    %1629 = vmatmul.mubr.f32.gmra.mrb[0].mxu0 %v1271
    %v1630 = vpop.f32.mrb[0].mxu0
    %v1631 = vadd.f32 0.0, %v1630
    %v1632 = vpop.f32.mrb[0].mxu0
    %1633 = vmatprep.mubr.f32.mxu0 0.0
    %1634 = vmatmul.mubr.f32.gmra.mrb[0].mxu0 %v1270
    %v1635 = vpop.f32.mrb[0].mxu0
    %v1636 = vadd.f32 0.0, %v1635
    %v1637 = vpop.f32.mrb[0].mxu0
    %1638 = vmatprep.mubr.f32.mxu0 0.0
    %1639 = vmatmul.mubr.f32.gmra.mrb[0].mxu0 %v1277
    %v1640 = vpop.f32.mrb[0].mxu0
    %v1641 = vadd.f32 0.0, %v1640
    %v1642 = vpop.f32.mrb[0].mxu0
    %1643 = vdwg.mxu0
    %v1644 = vadd.f32 %v1484, %v1606
    %v1645 = vadd.f32 %v1489, %v1611
    %v1646 = vadd.f32 %v1494, %v1616
    %v1647 = vadd.f32 %v1499, %v1621
    %v1648 = vadd.f32 %v1504, %v1626
    %v1649 = vadd.f32 %v1509, %v1631
    %v1650 = vadd.f32 %v1514, %v1636
    %v1651 = vadd.f32 %v1519, %v1641
    %v1652 = vld [vmem:[#allocation7 + $0x3] sm:$0x1]
    %v1653 = vlaneseq
    %v1654 = vshrl.u32 %v1653, 7
    %v1655 = vsub.s32 0, %v1654
    %v1656 = vrot.slane %v1652, %v1655
    %v1657 = vmul.f32 %v1644, %v1656
    %v1658 = vmul.f32 %v1645, %v1656
    %v1659 = vmul.f32 %v1646, %v1656
    %v1660 = vmul.f32 %v1647, %v1656
    %v1661 = vmul.f32 %v1648, %v1656
    %v1662 = vmul.f32 %v1649, %v1656
    %v1663 = vmul.f32 %v1650, %v1656
    %v1664 = vmul.f32 %v1651, %v1656
    %v1665 = vld [vmem:[#allocation7 + $0x5] sm:$0x1]
    %v1666 = vlaneseq
    %v1667 = vshrl.u32 %v1666, 7
    %v1668 = vsub.s32 0, %v1667
    %v1669 = vrot.slane %v1665, %v1668
    %v1670 = vadd.f32 %v1657, %v1669
    %v1671 = vadd.f32 %v1658, %v1669
    %v1672 = vadd.f32 %v1659, %v1669
    %v1673 = vadd.f32 %v1660, %v1669
    %v1674 = vadd.f32 %v1661, %v1669
    %v1675 = vadd.f32 %v1662, %v1669
    %v1676 = vadd.f32 %v1663, %v1669
    %v1677 = vadd.f32 %v1664, %v1669
    %v1678 = vmax.f32 %v1670, 0.0
    %v1679 = vmax.f32 %v1671, 0.0
    %v1680 = vmax.f32 %v1672, 0.0
    %v1681 = vmax.f32 %v1673, 0.0
    %v1682 = vmax.f32 %v1674, 0.0
    %v1683 = vmax.f32 %v1675, 0.0
    %v1684 = vmax.f32 %v1676, 0.0
    %v1685 = vmax.f32 %v1677, 0.0
    %v1686 = vsel %vm161, %v1678, 0.0
    %v1687 = vsel %vm162, %v1679, 0.0
    %v1688 = vsel %vm163, %v1680, 0.0
    %v1689 = vsel %vm164, %v1681, 0.0
    %v1690 = vsel %vm165, %v1682, 0.0
    %v1691 = vsel %vm166, %v1683, 0.0
    %v1692 = vsel %vm167, %v1684, 0.0
    %v1693 = vsel %vm168, %v1685, 0.0
    %v1694 = vrot.slane %v1686, 7
    %v1695 = vrot.slane %v1687, 7
    %v1696 = vrot.slane %v1688, 7
    %v1697 = vrot.slane %v1689, 7
    %v1698 = vrot.slane %v1690, 7
    %v1699 = vrot.slane %v1691, 7
    %v1700 = vrot.slane %v1692, 7
    %v1701 = vrot.slane %v1693, 7
    %v1702 = vsel %vm348, %v1700, %v1701
    %v1703 = vsel %vm348, %v1699, %v1700
    %v1704 = vsel %vm348, %v1698, %v1699
    %v1705 = vsel %vm348, %v1697, %v1698
    %v1706 = vsel %vm348, %v1696, %v1697
    %v1707 = vsel %vm348, %v1695, %v1696
    %v1708 = vsel %vm348, %v1694, %v1695
    %v1709 = vsel %vm348, %v1701, %v1694
    %v1710 = vrot.slane %v1686, 1
    %v1711 = vrot.slane %v1687, 1
    %v1712 = vrot.slane %v1688, 1
    %v1713 = vrot.slane %v1689, 1
    %v1714 = vrot.slane %v1690, 1
    %v1715 = vrot.slane %v1691, 1
    %v1716 = vrot.slane %v1692, 1
    %v1717 = vrot.slane %v1693, 1
    %v1718 = vsel %vm365, %v1716, %v1717
    %v1719 = vsel %vm365, %v1715, %v1716
    %v1720 = vsel %vm365, %v1714, %v1715
    %v1721 = vsel %vm365, %v1713, %v1714
    %v1722 = vsel %vm365, %v1712, %v1713
    %v1723 = vsel %vm365, %v1711, %v1712
    %v1724 = vsel %vm365, %v1710, %v1711
    %v1725 = vsel %vm365, %v1717, %v1710
    %s1726 = scalar_lea.vmem [#allocation5], 1536
    %v1727 = vld [vmem:[%s1726] sm:$0xff]
    %v1728 = vld [vmem:[%s1726 + $0x8] sm:$0xff]
    %v1729 = vld [vmem:[%s1726 + $0x10] sm:$0xff]
    %v1730 = vld [vmem:[%s1726 + $0x18] sm:$0xff]
    %v1731 = vld [vmem:[%s1726 + $0x20] sm:$0xff]
    %v1732 = vld [vmem:[%s1726 + $0x28] sm:$0xff]
    %v1733 = vld [vmem:[%s1726 + $0x30] sm:$0xff]
    %v1734 = vld [vmem:[%s1726 + $0x38] sm:$0xff]
    %v1735 = vld [vmem:[%s1726 + $0x40] sm:$0xff]
    %v1736 = vld [vmem:[%s1726 + $0x48] sm:$0xff]
    %v1737 = vld [vmem:[%s1726 + $0x50] sm:$0xff]
    %v1738 = vld [vmem:[%s1726 + $0x58] sm:$0xff]
    %v1739 = vld [vmem:[%s1726 + $0x60] sm:$0xff]
    %v1740 = vld [vmem:[%s1726 + $0x68] sm:$0xff]
    %v1741 = vld [vmem:[%s1726 + $0x70] sm:$0xff]
    %v1742 = vld [vmem:[%s1726 + $0x78] sm:$0xff]
    %s1743 = scalar_lea.vmem [#allocation5], 1664
    %v1744 = vld [vmem:[%s1743] sm:$0xff]
    %v1745 = vld [vmem:[%s1743 + $0x8] sm:$0xff]
    %v1746 = vld [vmem:[%s1743 + $0x10] sm:$0xff]
    %v1747 = vld [vmem:[%s1743 + $0x18] sm:$0xff]
    %v1748 = vld [vmem:[%s1743 + $0x20] sm:$0xff]
    %v1749 = vld [vmem:[%s1743 + $0x28] sm:$0xff]
    %v1750 = vld [vmem:[%s1743 + $0x30] sm:$0xff]
    %v1751 = vld [vmem:[%s1743 + $0x38] sm:$0xff]
    %v1752 = vld [vmem:[%s1743 + $0x40] sm:$0xff]
    %v1753 = vld [vmem:[%s1743 + $0x48] sm:$0xff]
    %v1754 = vld [vmem:[%s1743 + $0x50] sm:$0xff]
    %v1755 = vld [vmem:[%s1743 + $0x58] sm:$0xff]
    %v1756 = vld [vmem:[%s1743 + $0x60] sm:$0xff]
    %v1757 = vld [vmem:[%s1743 + $0x68] sm:$0xff]
    %v1758 = vld [vmem:[%s1743 + $0x70] sm:$0xff]
    %v1759 = vld [vmem:[%s1743 + $0x78] sm:$0xff]
    %1760 = vmatprep.subr.mxu0 0.0
    %1761 = vmatpush1.msra.mxu0 %v1744
    %1762 = vmatprep.subr.mxu0 0.0
    %1763 = vmatpush1.msra.mxu0 %v1745
    %1764 = vmatprep.subr.mxu0 0.0
    %1765 = vmatpush1.msra.mxu0 %v1746
    %1766 = vmatprep.subr.mxu0 0.0
    %1767 = vmatpush1.msra.mxu0 %v1747
    %1768 = vmatprep.subr.mxu0 0.0
    %1769 = vmatpush1.msra.mxu0 %v1748
    %1770 = vmatprep.subr.mxu0 0.0
    %1771 = vmatpush1.msra.mxu0 %v1749
    %1772 = vmatprep.subr.mxu0 0.0
    %1773 = vmatpush1.msra.mxu0 %v1750
    %1774 = vmatprep.subr.mxu0 0.0
    %1775 = vmatpush1.msra.mxu0 %v1751
    %1776 = vmatprep.subr.mxu0 0.0
    %1777 = vmatpush1.msra.mxu0 %v1752
    %1778 = vmatprep.subr.mxu0 0.0
    %1779 = vmatpush1.msra.mxu0 %v1753
    %1780 = vmatprep.subr.mxu0 0.0
    %1781 = vmatpush1.msra.mxu0 %v1754
    %1782 = vmatprep.subr.mxu0 0.0
    %1783 = vmatpush1.msra.mxu0 %v1755
    %1784 = vmatprep.subr.mxu0 0.0
    %1785 = vmatpush1.msra.mxu0 %v1756
    %1786 = vmatprep.subr.mxu0 0.0
    %1787 = vmatpush1.msra.mxu0 %v1757
    %1788 = vmatprep.subr.mxu0 0.0
    %1789 = vmatpush1.msra.mxu0 %v1758
    %1790 = vmatprep.subr.mxu0 0.0
    %1791 = vmatpush1.msra.mxu0 %v1759
    %1792 = vmatprep.subr.mxu0 0.0
    %1793 = vmatpush1.msra.mxu0 0.0
    %1794 = vmatprep.subr.mxu0 0.0
    %1795 = vmatpush1.msra.mxu0 0.0
    %1796 = vmatprep.subr.mxu0 0.0
    %1797 = vmatpush1.msra.mxu0 0.0
    %1798 = vmatprep.subr.mxu0 0.0
    %1799 = vmatpush1.msra.mxu0 0.0
    %1800 = vmatprep.subr.mxu0 0.0
    %1801 = vmatpush1.msra.mxu0 0.0
    %1802 = vmatprep.subr.mxu0 0.0
    %1803 = vmatpush1.msra.mxu0 0.0
    %1804 = vmatprep.subr.mxu0 0.0
    %1805 = vmatpush1.msra.mxu0 0.0
    %1806 = vmatprep.subr.mxu0 0.0
    %1807 = vmatpush1.msra.mxu0 0.0
    %1808 = vmatprep.subr.mxu0 0.0
    %1809 = vmatpush1.msra.mxu0 0.0
    %1810 = vmatprep.subr.mxu0 0.0
    %1811 = vmatpush1.msra.mxu0 0.0
    %1812 = vmatprep.subr.mxu0 0.0
    %1813 = vmatpush1.msra.mxu0 0.0
    %1814 = vmatprep.subr.mxu0 0.0
    %1815 = vmatpush1.msra.mxu0 0.0
    %1816 = vmatprep.subr.mxu0 0.0
    %1817 = vmatpush1.msra.mxu0 0.0
    %1818 = vmatprep.subr.mxu0 0.0
    %1819 = vmatpush1.msra.mxu0 0.0
    %1820 = vmatprep.subr.mxu0 0.0
    %1821 = vmatpush1.msra.mxu0 0.0
    %1822 = vmatprep.subr.mxu0 0.0
    %1823 = vmatpush1.msra.mxu0 0.0
    %1824 = vmatprep.mubr.f32.mxu0 0.0
    %1825 = vmatmul.mubr.f32.gmra.mrb[0].mxu0 %v1686
    %v1826 = vpop.f32.mrb[0].mxu0
    %v1827 = vadd.f32 0.0, %v1826
    %v1828 = vpop.f32.mrb[0].mxu0
    %1829 = vmatprep.mubr.f32.mxu0 0.0
    %1830 = vmatmul.mubr.f32.gmra.mrb[0].mxu0 %v1687
    %v1831 = vpop.f32.mrb[0].mxu0
    %v1832 = vadd.f32 0.0, %v1831
    %v1833 = vpop.f32.mrb[0].mxu0
    %1834 = vmatprep.mubr.f32.mxu0 0.0
    %1835 = vmatmul.mubr.f32.gmra.mrb[0].mxu0 %v1688
    %v1836 = vpop.f32.mrb[0].mxu0
    %v1837 = vadd.f32 0.0, %v1836
    %v1838 = vpop.f32.mrb[0].mxu0
    %1839 = vmatprep.mubr.f32.mxu0 0.0
    %1840 = vmatmul.mubr.f32.gmra.mrb[0].mxu0 %v1689
    %v1841 = vpop.f32.mrb[0].mxu0
    %v1842 = vadd.f32 0.0, %v1841
    %v1843 = vpop.f32.mrb[0].mxu0
    %1844 = vmatprep.mubr.f32.mxu0 0.0
    %1845 = vmatmul.mubr.f32.gmra.mrb[0].mxu0 %v1690
    %v1846 = vpop.f32.mrb[0].mxu0
    %v1847 = vadd.f32 0.0, %v1846
    %v1848 = vpop.f32.mrb[0].mxu0
    %1849 = vmatprep.mubr.f32.mxu0 0.0
    %1850 = vmatmul.mubr.f32.gmra.mrb[0].mxu0 %v1691
    %v1851 = vpop.f32.mrb[0].mxu0
    %v1852 = vadd.f32 0.0, %v1851
    %v1853 = vpop.f32.mrb[0].mxu0
    %1854 = vmatprep.mubr.f32.mxu0 0.0
    %1855 = vmatmul.mubr.f32.gmra.mrb[0].mxu0 %v1692
    %v1856 = vpop.f32.mrb[0].mxu0
    %v1857 = vadd.f32 0.0, %v1856
    %v1858 = vpop.f32.mrb[0].mxu0
    %1859 = vmatprep.mubr.f32.mxu0 0.0
    %1860 = vmatmul.mubr.f32.gmra.mrb[0].mxu0 %v1693
    %v1861 = vpop.f32.mrb[0].mxu0
    %v1862 = vadd.f32 0.0, %v1861
    %v1863 = vpop.f32.mrb[0].mxu0
    %1864 = vdwg.mxu0
    %1865 = vmatprep.subr.mxu0 0.0
    %1866 = vmatpush1.msra.mxu0 %v1727
    %1867 = vmatprep.subr.mxu0 0.0
    %1868 = vmatpush1.msra.mxu0 %v1728
    %1869 = vmatprep.subr.mxu0 0.0
    %1870 = vmatpush1.msra.mxu0 %v1729
    %1871 = vmatprep.subr.mxu0 0.0
    %1872 = vmatpush1.msra.mxu0 %v1730
    %1873 = vmatprep.subr.mxu0 0.0
    %1874 = vmatpush1.msra.mxu0 %v1731
    %1875 = vmatprep.subr.mxu0 0.0
    %1876 = vmatpush1.msra.mxu0 %v1732
    %1877 = vmatprep.subr.mxu0 0.0
    %1878 = vmatpush1.msra.mxu0 %v1733
    %1879 = vmatprep.subr.mxu0 0.0
    %1880 = vmatpush1.msra.mxu0 %v1734
    %1881 = vmatprep.subr.mxu0 0.0
    %1882 = vmatpush1.msra.mxu0 %v1735
    %1883 = vmatprep.subr.mxu0 0.0
    %1884 = vmatpush1.msra.mxu0 %v1736
    %1885 = vmatprep.subr.mxu0 0.0
    %1886 = vmatpush1.msra.mxu0 %v1737
    %1887 = vmatprep.subr.mxu0 0.0
    %1888 = vmatpush1.msra.mxu0 %v1738
    %1889 = vmatprep.subr.mxu0 0.0
    %1890 = vmatpush1.msra.mxu0 %v1739
    %1891 = vmatprep.subr.mxu0 0.0
    %1892 = vmatpush1.msra.mxu0 %v1740
    %1893 = vmatprep.subr.mxu0 0.0
    %1894 = vmatpush1.msra.mxu0 %v1741
    %1895 = vmatprep.subr.mxu0 0.0
    %1896 = vmatpush1.msra.mxu0 %v1742
    %1897 = vmatprep.subr.mxu0 0.0
    %1898 = vmatpush1.msra.mxu0 0.0
    %1899 = vmatprep.subr.mxu0 0.0
    %1900 = vmatpush1.msra.mxu0 0.0
    %1901 = vmatprep.subr.mxu0 0.0
    %1902 = vmatpush1.msra.mxu0 0.0
    %1903 = vmatprep.subr.mxu0 0.0
    %1904 = vmatpush1.msra.mxu0 0.0
    %1905 = vmatprep.subr.mxu0 0.0
    %1906 = vmatpush1.msra.mxu0 0.0
    %1907 = vmatprep.subr.mxu0 0.0
    %1908 = vmatpush1.msra.mxu0 0.0
    %1909 = vmatprep.subr.mxu0 0.0
    %1910 = vmatpush1.msra.mxu0 0.0
    %1911 = vmatprep.subr.mxu0 0.0
    %1912 = vmatpush1.msra.mxu0 0.0
    %1913 = vmatprep.subr.mxu0 0.0
    %1914 = vmatpush1.msra.mxu0 0.0
    %1915 = vmatprep.subr.mxu0 0.0
    %1916 = vmatpush1.msra.mxu0 0.0
    %1917 = vmatprep.subr.mxu0 0.0
    %1918 = vmatpush1.msra.mxu0 0.0
    %1919 = vmatprep.subr.mxu0 0.0
    %1920 = vmatpush1.msra.mxu0 0.0
    %1921 = vmatprep.subr.mxu0 0.0
    %1922 = vmatpush1.msra.mxu0 0.0
    %1923 = vmatprep.subr.mxu0 0.0
    %1924 = vmatpush1.msra.mxu0 0.0
    %1925 = vmatprep.subr.mxu0 0.0
    %1926 = vmatpush1.msra.mxu0 0.0
    %1927 = vmatprep.subr.mxu0 0.0
    %1928 = vmatpush1.msra.mxu0 0.0
    %1929 = vmatprep.mubr.f32.mxu0 0.0
    %1930 = vmatmul.mubr.f32.gmra.mrb[0].mxu0 %v1709
    %v1931 = vpop.f32.mrb[0].mxu0
    %v1932 = vadd.f32 %v1827, %v1931
    %v1933 = vpop.f32.mrb[0].mxu0
    %1934 = vmatprep.mubr.f32.mxu0 0.0
    %1935 = vmatmul.mubr.f32.gmra.mrb[0].mxu0 %v1708
    %v1936 = vpop.f32.mrb[0].mxu0
    %v1937 = vadd.f32 %v1832, %v1936
    %v1938 = vpop.f32.mrb[0].mxu0
    %1939 = vmatprep.mubr.f32.mxu0 0.0
    %1940 = vmatmul.mubr.f32.gmra.mrb[0].mxu0 %v1707
    %v1941 = vpop.f32.mrb[0].mxu0
    %v1942 = vadd.f32 %v1837, %v1941
    %v1943 = vpop.f32.mrb[0].mxu0
    %1944 = vmatprep.mubr.f32.mxu0 0.0
    %1945 = vmatmul.mubr.f32.gmra.mrb[0].mxu0 %v1706
    %v1946 = vpop.f32.mrb[0].mxu0
    %v1947 = vadd.f32 %v1842, %v1946
    %v1948 = vpop.f32.mrb[0].mxu0
    %1949 = vmatprep.mubr.f32.mxu0 0.0
    %1950 = vmatmul.mubr.f32.gmra.mrb[0].mxu0 %v1705
    %v1951 = vpop.f32.mrb[0].mxu0
    %v1952 = vadd.f32 %v1847, %v1951
    %v1953 = vpop.f32.mrb[0].mxu0
    %1954 = vmatprep.mubr.f32.mxu0 0.0
    %1955 = vmatmul.mubr.f32.gmra.mrb[0].mxu0 %v1704
    %v1956 = vpop.f32.mrb[0].mxu0
    %v1957 = vadd.f32 %v1852, %v1956
    %v1958 = vpop.f32.mrb[0].mxu0
    %1959 = vmatprep.mubr.f32.mxu0 0.0
    %1960 = vmatmul.mubr.f32.gmra.mrb[0].mxu0 %v1703
    %v1961 = vpop.f32.mrb[0].mxu0
    %v1962 = vadd.f32 %v1857, %v1961
    %v1963 = vpop.f32.mrb[0].mxu0
    %1964 = vmatprep.mubr.f32.mxu0 0.0
    %1965 = vmatmul.mubr.f32.gmra.mrb[0].mxu0 %v1702
    %v1966 = vpop.f32.mrb[0].mxu0
    %v1967 = vadd.f32 %v1862, %v1966
    %v1968 = vpop.f32.mrb[0].mxu0
    %1969 = vdwg.mxu0
    %s1970 = scalar_lea.vmem [#allocation5], 1792
    %v1971 = vld [vmem:[%s1970] sm:$0xff]
    %v1972 = vld [vmem:[%s1970 + $0x8] sm:$0xff]
    %v1973 = vld [vmem:[%s1970 + $0x10] sm:$0xff]
    %v1974 = vld [vmem:[%s1970 + $0x18] sm:$0xff]
    %v1975 = vld [vmem:[%s1970 + $0x20] sm:$0xff]
    %v1976 = vld [vmem:[%s1970 + $0x28] sm:$0xff]
    %v1977 = vld [vmem:[%s1970 + $0x30] sm:$0xff]
    %v1978 = vld [vmem:[%s1970 + $0x38] sm:$0xff]
    %v1979 = vld [vmem:[%s1970 + $0x40] sm:$0xff]
    %v1980 = vld [vmem:[%s1970 + $0x48] sm:$0xff]
    %v1981 = vld [vmem:[%s1970 + $0x50] sm:$0xff]
    %v1982 = vld [vmem:[%s1970 + $0x58] sm:$0xff]
    %v1983 = vld [vmem:[%s1970 + $0x60] sm:$0xff]
    %v1984 = vld [vmem:[%s1970 + $0x68] sm:$0xff]
    %v1985 = vld [vmem:[%s1970 + $0x70] sm:$0xff]
    %v1986 = vld [vmem:[%s1970 + $0x78] sm:$0xff]
    %1987 = vmatprep.subr.mxu0 0.0
    %1988 = vmatpush1.msra.mxu0 %v1971
    %1989 = vmatprep.subr.mxu0 0.0
    %1990 = vmatpush1.msra.mxu0 %v1972
    %1991 = vmatprep.subr.mxu0 0.0
    %1992 = vmatpush1.msra.mxu0 %v1973
    %1993 = vmatprep.subr.mxu0 0.0
    %1994 = vmatpush1.msra.mxu0 %v1974
    %1995 = vmatprep.subr.mxu0 0.0
    %1996 = vmatpush1.msra.mxu0 %v1975
    %1997 = vmatprep.subr.mxu0 0.0
    %1998 = vmatpush1.msra.mxu0 %v1976
    %1999 = vmatprep.subr.mxu0 0.0
    %2000 = vmatpush1.msra.mxu0 %v1977
    %2001 = vmatprep.subr.mxu0 0.0
    %2002 = vmatpush1.msra.mxu0 %v1978
    %2003 = vmatprep.subr.mxu0 0.0
    %2004 = vmatpush1.msra.mxu0 %v1979
    %2005 = vmatprep.subr.mxu0 0.0
    %2006 = vmatpush1.msra.mxu0 %v1980
    %2007 = vmatprep.subr.mxu0 0.0
    %2008 = vmatpush1.msra.mxu0 %v1981
    %2009 = vmatprep.subr.mxu0 0.0
    %2010 = vmatpush1.msra.mxu0 %v1982
    %2011 = vmatprep.subr.mxu0 0.0
    %2012 = vmatpush1.msra.mxu0 %v1983
    %2013 = vmatprep.subr.mxu0 0.0
    %2014 = vmatpush1.msra.mxu0 %v1984
    %2015 = vmatprep.subr.mxu0 0.0
    %2016 = vmatpush1.msra.mxu0 %v1985
    %2017 = vmatprep.subr.mxu0 0.0
    %2018 = vmatpush1.msra.mxu0 %v1986
    %2019 = vmatprep.subr.mxu0 0.0
    %2020 = vmatpush1.msra.mxu0 0.0
    %2021 = vmatprep.subr.mxu0 0.0
    %2022 = vmatpush1.msra.mxu0 0.0
    %2023 = vmatprep.subr.mxu0 0.0
    %2024 = vmatpush1.msra.mxu0 0.0
    %2025 = vmatprep.subr.mxu0 0.0
    %2026 = vmatpush1.msra.mxu0 0.0
    %2027 = vmatprep.subr.mxu0 0.0
    %2028 = vmatpush1.msra.mxu0 0.0
    %2029 = vmatprep.subr.mxu0 0.0
    %2030 = vmatpush1.msra.mxu0 0.0
    %2031 = vmatprep.subr.mxu0 0.0
    %2032 = vmatpush1.msra.mxu0 0.0
    %2033 = vmatprep.subr.mxu0 0.0
    %2034 = vmatpush1.msra.mxu0 0.0
    %2035 = vmatprep.subr.mxu0 0.0
    %2036 = vmatpush1.msra.mxu0 0.0
    %2037 = vmatprep.subr.mxu0 0.0
    %2038 = vmatpush1.msra.mxu0 0.0
    %2039 = vmatprep.subr.mxu0 0.0
    %2040 = vmatpush1.msra.mxu0 0.0
    %2041 = vmatprep.subr.mxu0 0.0
    %2042 = vmatpush1.msra.mxu0 0.0
    %2043 = vmatprep.subr.mxu0 0.0
    %2044 = vmatpush1.msra.mxu0 0.0
    %2045 = vmatprep.subr.mxu0 0.0
    %2046 = vmatpush1.msra.mxu0 0.0
    %2047 = vmatprep.subr.mxu0 0.0
    %2048 = vmatpush1.msra.mxu0 0.0
    %2049 = vmatprep.subr.mxu0 0.0
    %2050 = vmatpush1.msra.mxu0 0.0
    %2051 = vmatprep.mubr.f32.mxu0 0.0
    %2052 = vmatmul.mubr.f32.gmra.mrb[0].mxu0 %v1724
    %v2053 = vpop.f32.mrb[0].mxu0
    %v2054 = vadd.f32 0.0, %v2053
    %v2055 = vpop.f32.mrb[0].mxu0
    %2056 = vmatprep.mubr.f32.mxu0 0.0
    %2057 = vmatmul.mubr.f32.gmra.mrb[0].mxu0 %v1723
    %v2058 = vpop.f32.mrb[0].mxu0
    %v2059 = vadd.f32 0.0, %v2058
    %v2060 = vpop.f32.mrb[0].mxu0
    %2061 = vmatprep.mubr.f32.mxu0 0.0
    %2062 = vmatmul.mubr.f32.gmra.mrb[0].mxu0 %v1722
    %v2063 = vpop.f32.mrb[0].mxu0
    %v2064 = vadd.f32 0.0, %v2063
    %v2065 = vpop.f32.mrb[0].mxu0
    %2066 = vmatprep.mubr.f32.mxu0 0.0
    %2067 = vmatmul.mubr.f32.gmra.mrb[0].mxu0 %v1721
    %v2068 = vpop.f32.mrb[0].mxu0
    %v2069 = vadd.f32 0.0, %v2068
    %v2070 = vpop.f32.mrb[0].mxu0
    %2071 = vmatprep.mubr.f32.mxu0 0.0
    %2072 = vmatmul.mubr.f32.gmra.mrb[0].mxu0 %v1720
    %v2073 = vpop.f32.mrb[0].mxu0
    %v2074 = vadd.f32 0.0, %v2073
    %v2075 = vpop.f32.mrb[0].mxu0
    %2076 = vmatprep.mubr.f32.mxu0 0.0
    %2077 = vmatmul.mubr.f32.gmra.mrb[0].mxu0 %v1719
    %v2078 = vpop.f32.mrb[0].mxu0
    %v2079 = vadd.f32 0.0, %v2078
    %v2080 = vpop.f32.mrb[0].mxu0
    %2081 = vmatprep.mubr.f32.mxu0 0.0
    %2082 = vmatmul.mubr.f32.gmra.mrb[0].mxu0 %v1718
    %v2083 = vpop.f32.mrb[0].mxu0
    %v2084 = vadd.f32 0.0, %v2083
    %v2085 = vpop.f32.mrb[0].mxu0
    %2086 = vmatprep.mubr.f32.mxu0 0.0
    %2087 = vmatmul.mubr.f32.gmra.mrb[0].mxu0 %v1725
    %v2088 = vpop.f32.mrb[0].mxu0
    %v2089 = vadd.f32 0.0, %v2088
    %v2090 = vpop.f32.mrb[0].mxu0
    %2091 = vdwg.mxu0
    %v2092 = vadd.f32 %v1932, %v2054
    %v2093 = vadd.f32 %v1937, %v2059
    %v2094 = vadd.f32 %v1942, %v2064
    %v2095 = vadd.f32 %v1947, %v2069
    %v2096 = vadd.f32 %v1952, %v2074
    %v2097 = vadd.f32 %v1957, %v2079
    %v2098 = vadd.f32 %v1962, %v2084
    %v2099 = vadd.f32 %v1967, %v2089
    %v2100 = vld [vmem:[#allocation7 + $0x7] sm:$0x1]
    %v2101 = vlaneseq
    %v2102 = vshrl.u32 %v2101, 7
    %v2103 = vsub.s32 0, %v2102
    %v2104 = vrot.slane %v2100, %v2103
    %v2105 = vmul.f32 %v2092, %v2104
    %v2106 = vmul.f32 %v2093, %v2104
    %v2107 = vmul.f32 %v2094, %v2104
    %v2108 = vmul.f32 %v2095, %v2104
    %v2109 = vmul.f32 %v2096, %v2104
    %v2110 = vmul.f32 %v2097, %v2104
    %v2111 = vmul.f32 %v2098, %v2104
    %v2112 = vmul.f32 %v2099, %v2104
    %v2113 = vld [vmem:[#allocation7 + $0x9] sm:$0x1]
    %v2114 = vlaneseq
    %v2115 = vshrl.u32 %v2114, 7
    %v2116 = vsub.s32 0, %v2115
    %v2117 = vrot.slane %v2113, %v2116
    %v2118 = vadd.f32 %v2105, %v2117
    %v2119 = vadd.f32 %v2106, %v2117
    %v2120 = vadd.f32 %v2107, %v2117
    %v2121 = vadd.f32 %v2108, %v2117
    %v2122 = vadd.f32 %v2109, %v2117
    %v2123 = vadd.f32 %v2110, %v2117
    %v2124 = vadd.f32 %v2111, %v2117
    %v2125 = vadd.f32 %v2112, %v2117
    %v2126 = vadd.f32 %v2118, %v1238
    %v2127 = vadd.f32 %v2119, %v1239
    %v2128 = vadd.f32 %v2120, %v1240
    %v2129 = vadd.f32 %v2121, %v1241
    %v2130 = vadd.f32 %v2122, %v1242
    %v2131 = vadd.f32 %v2123, %v1243
    %v2132 = vadd.f32 %v2124, %v1244
    %v2133 = vadd.f32 %v2125, %v1245
    %v2134 = vmax.f32 %v2126, 0.0
    %v2135 = vmax.f32 %v2127, 0.0
    %v2136 = vmax.f32 %v2128, 0.0
    %v2137 = vmax.f32 %v2129, 0.0
    %v2138 = vmax.f32 %v2130, 0.0
    %v2139 = vmax.f32 %v2131, 0.0
    %v2140 = vmax.f32 %v2132, 0.0
    %v2141 = vmax.f32 %v2133, 0.0
    %v2142 = vsel %vm161, %v2134, -3.4028235e+38
    %v2143 = vsel %vm162, %v2135, -3.4028235e+38
    %v2144 = vsel %vm163, %v2136, -3.4028235e+38
    %v2145 = vsel %vm164, %v2137, -3.4028235e+38
    %v2146 = vsel %vm165, %v2138, -3.4028235e+38
    %v2147 = vsel %vm166, %v2139, -3.4028235e+38
    %v2148 = vsel %vm167, %v2140, -3.4028235e+38
    %v2149 = vsel %vm168, %v2141, -3.4028235e+38
    %v2150 = vmax.f32 %v2142, %v2144
    %v2151 = vmax.f32 %v2143, %v2145
    %v2152 = vmax.f32 %v2150, %v2151
    %v2153 = vrot.slane %v2152, 4
    %v2154 = vmax.f32 %v2152, %v2153
    %v2155 = vrot.slane %v2154, 2
    %v2156 = vmax.f32 %v2154, %v2155
    %v2157 = vrot.slane %v2156, 1
    %v2158 = vmax.f32 %v2156, %v2157
    %v2159 = vmax.f32 %v2146, %v2148
    %v2160 = vmax.f32 %v2147, %v2149
    %v2161 = vmax.f32 %v2159, %v2160
    %v2162 = vrot.slane %v2161, 4
    %v2163 = vmax.f32 %v2161, %v2162
    %v2164 = vrot.slane %v2163, 2
    %v2165 = vmax.f32 %v2163, %v2164
    %v2166 = vrot.slane %v2165, 1
    %v2167 = vmax.f32 %v2165, %v2166
    %vm2170 = vcmask 1041409
    %v2171 = vsel %vm2170, %v2167, %v2158
    %vm2173 = vcmask 1041408
    %v2174 = vsel %vm2173, %v2171, 0.0
    %s2175 = scalar_lea.vmem [#allocation5], 128
    %v2176 = vld [vmem:[%s2175] sm:$0xff]
    %v2177 = vld [vmem:[%s2175 + $0x8] sm:$0xff]
    %v2178 = vld [vmem:[%s2175 + $0x10] sm:$0xff]
    %v2179 = vld [vmem:[%s2175 + $0x18] sm:$0xff]
    %v2180 = vld [vmem:[%s2175 + $0x20] sm:$0xff]
    %v2181 = vld [vmem:[%s2175 + $0x28] sm:$0xff]
    %v2182 = vld [vmem:[%s2175 + $0x30] sm:$0xff]
    %v2183 = vld [vmem:[%s2175 + $0x38] sm:$0xff]
    %v2184 = vld [vmem:[%s2175 + $0x40] sm:$0xff]
    %v2185 = vld [vmem:[%s2175 + $0x48] sm:$0xff]
    %v2186 = vld [vmem:[%s2175 + $0x50] sm:$0xff]
    %v2187 = vld [vmem:[%s2175 + $0x58] sm:$0xff]
    %v2188 = vld [vmem:[%s2175 + $0x60] sm:$0xff]
    %v2189 = vld [vmem:[%s2175 + $0x68] sm:$0xff]
    %v2190 = vld [vmem:[%s2175 + $0x70] sm:$0xff]
    %v2191 = vld [vmem:[%s2175 + $0x78] sm:$0xff]
    %v2192 = vld [vmem:[#allocation7 + $0xa] sm:$0x1]
    %v2193 = vlaneseq
    %v2194 = vshrl.u32 %v2193, 7
    %v2195 = vsub.s32 0, %v2194
    %v2196 = vrot.slane %v2192, %v2195
    %2197 = vmatprep.subr.mxu0 0.0
    %2198 = vmatpush1.msra.mxu0 %v2176
    %2199 = vmatprep.subr.mxu0 0.0
    %2200 = vmatpush1.msra.mxu0 %v2177
    %2201 = vmatprep.subr.mxu0 0.0
    %2202 = vmatpush1.msra.mxu0 %v2178
    %2203 = vmatprep.subr.mxu0 0.0
    %2204 = vmatpush1.msra.mxu0 %v2179
    %2205 = vmatprep.subr.mxu0 0.0
    %2206 = vmatpush1.msra.mxu0 %v2180
    %2207 = vmatprep.subr.mxu0 0.0
    %2208 = vmatpush1.msra.mxu0 %v2181
    %2209 = vmatprep.subr.mxu0 0.0
    %2210 = vmatpush1.msra.mxu0 %v2182
    %2211 = vmatprep.subr.mxu0 0.0
    %2212 = vmatpush1.msra.mxu0 %v2183
    %2213 = vmatprep.subr.mxu0 0.0
    %2214 = vmatpush1.msra.mxu0 %v2184
    %2215 = vmatprep.subr.mxu0 0.0
    %2216 = vmatpush1.msra.mxu0 %v2185
    %2217 = vmatprep.subr.mxu0 0.0
    %2218 = vmatpush1.msra.mxu0 %v2186
    %2219 = vmatprep.subr.mxu0 0.0
    %2220 = vmatpush1.msra.mxu0 %v2187
    %2221 = vmatprep.subr.mxu0 0.0
    %2222 = vmatpush1.msra.mxu0 %v2188
    %2223 = vmatprep.subr.mxu0 0.0
    %2224 = vmatpush1.msra.mxu0 %v2189
    %2225 = vmatprep.subr.mxu0 0.0
    %2226 = vmatpush1.msra.mxu0 %v2190
    %2227 = vmatprep.subr.mxu0 0.0
    %2228 = vmatpush1.msra.mxu0 %v2191
    %2229 = vmatprep.subr.mxu0 0.0
    %2230 = vmatpush1.msra.mxu0 0.0
    %2231 = vmatprep.subr.mxu0 0.0
    %2232 = vmatpush1.msra.mxu0 0.0
    %2233 = vmatprep.subr.mxu0 0.0
    %2234 = vmatpush1.msra.mxu0 0.0
    %2235 = vmatprep.subr.mxu0 0.0
    %2236 = vmatpush1.msra.mxu0 0.0
    %2237 = vmatprep.subr.mxu0 0.0
    %2238 = vmatpush1.msra.mxu0 0.0
    %2239 = vmatprep.subr.mxu0 0.0
    %2240 = vmatpush1.msra.mxu0 0.0
    %2241 = vmatprep.subr.mxu0 0.0
    %2242 = vmatpush1.msra.mxu0 0.0
    %2243 = vmatprep.subr.mxu0 0.0
    %2244 = vmatpush1.msra.mxu0 0.0
    %2245 = vmatprep.subr.mxu0 0.0
    %2246 = vmatpush1.msra.mxu0 0.0
    %2247 = vmatprep.subr.mxu0 0.0
    %2248 = vmatpush1.msra.mxu0 0.0
    %2249 = vmatprep.subr.mxu0 0.0
    %2250 = vmatpush1.msra.mxu0 0.0
    %2251 = vmatprep.subr.mxu0 0.0
    %2252 = vmatpush1.msra.mxu0 0.0
    %2253 = vmatprep.subr.mxu0 0.0
    %2254 = vmatpush1.msra.mxu0 0.0
    %2255 = vmatprep.subr.mxu0 0.0
    %2256 = vmatpush1.msra.mxu0 0.0
    %2257 = vmatprep.subr.mxu0 0.0
    %2258 = vmatpush1.msra.mxu0 0.0
    %2259 = vmatprep.subr.mxu0 0.0
    %2260 = vmatpush1.msra.mxu0 0.0
    %2261 = vmatprep.mubr.f32.mxu0 0.0
    %2262 = vmatmul.mubr.f32.gmra.mrb[0].mxu0 %v2174
    %v2263 = vpop.f32.mrb[0].mxu0
    %v2264 = vadd.f32 %v2196, %v2263
    %v2265 = vpop.f32.mrb[0].mxu0
    %2266 = vdwg.mxu0
    %v2267 = vmax.f32 %v2264, 0.0
    %s2268 = scalar_lea.vmem [#allocation5], 256
    %v2269 = vld [vmem:[%s2268] sm:$0xff]
    %v2270 = vld [vmem:[%s2268 + $0x8] sm:$0xff]
    %v2271 = vld [vmem:[%s2268 + $0x10] sm:$0xff]
    %v2272 = vld [vmem:[%s2268 + $0x18] sm:$0xff]
    %v2273 = vld [vmem:[%s2268 + $0x20] sm:$0xff]
    %v2274 = vld [vmem:[%s2268 + $0x28] sm:$0xff]
    %v2275 = vld [vmem:[%s2268 + $0x30] sm:$0xff]
    %v2276 = vld [vmem:[%s2268 + $0x38] sm:$0xff]
    %v2277 = vld [vmem:[%s2268 + $0x40] sm:$0xff]
    %v2278 = vld [vmem:[%s2268 + $0x48] sm:$0xff]
    %v2279 = vld [vmem:[%s2268 + $0x50] sm:$0xff]
    %v2280 = vld [vmem:[%s2268 + $0x58] sm:$0xff]
    %v2281 = vld [vmem:[%s2268 + $0x60] sm:$0xff]
    %v2282 = vld [vmem:[%s2268 + $0x68] sm:$0xff]
    %v2283 = vld [vmem:[%s2268 + $0x70] sm:$0xff]
    %v2284 = vld [vmem:[%s2268 + $0x78] sm:$0xff]
    %v2285 = vld [vmem:[#allocation7 + $0xb] sm:$0x1]
    %v2286 = vlaneseq
    %v2287 = vshrl.u32 %v2286, 7
    %v2288 = vsub.s32 0, %v2287
    %v2289 = vrot.slane %v2285, %v2288
    %2290 = vmatprep.subr.mxu0 0.0
    %2291 = vmatpush1.msra.mxu0 %v2269
    %2292 = vmatprep.subr.mxu0 0.0
    %2293 = vmatpush1.msra.mxu0 %v2270
    %2294 = vmatprep.subr.mxu0 0.0
    %2295 = vmatpush1.msra.mxu0 %v2271
    %2296 = vmatprep.subr.mxu0 0.0
    %2297 = vmatpush1.msra.mxu0 %v2272
    %2298 = vmatprep.subr.mxu0 0.0
    %2299 = vmatpush1.msra.mxu0 %v2273
    %2300 = vmatprep.subr.mxu0 0.0
    %2301 = vmatpush1.msra.mxu0 %v2274
    %2302 = vmatprep.subr.mxu0 0.0
    %2303 = vmatpush1.msra.mxu0 %v2275
    %2304 = vmatprep.subr.mxu0 0.0
    %2305 = vmatpush1.msra.mxu0 %v2276
    %2306 = vmatprep.subr.mxu0 0.0
    %2307 = vmatpush1.msra.mxu0 %v2277
    %2308 = vmatprep.subr.mxu0 0.0
    %2309 = vmatpush1.msra.mxu0 %v2278
    %2310 = vmatprep.subr.mxu0 0.0
    %2311 = vmatpush1.msra.mxu0 %v2279
    %2312 = vmatprep.subr.mxu0 0.0
    %2313 = vmatpush1.msra.mxu0 %v2280
    %2314 = vmatprep.subr.mxu0 0.0
    %2315 = vmatpush1.msra.mxu0 %v2281
    %2316 = vmatprep.subr.mxu0 0.0
    %2317 = vmatpush1.msra.mxu0 %v2282
    %2318 = vmatprep.subr.mxu0 0.0
    %2319 = vmatpush1.msra.mxu0 %v2283
    %2320 = vmatprep.subr.mxu0 0.0
    %2321 = vmatpush1.msra.mxu0 %v2284
    %2322 = vmatprep.subr.mxu0 0.0
    %2323 = vmatpush1.msra.mxu0 0.0
    %2324 = vmatprep.subr.mxu0 0.0
    %2325 = vmatpush1.msra.mxu0 0.0
    %2326 = vmatprep.subr.mxu0 0.0
    %2327 = vmatpush1.msra.mxu0 0.0
    %2328 = vmatprep.subr.mxu0 0.0
    %2329 = vmatpush1.msra.mxu0 0.0
    %2330 = vmatprep.subr.mxu0 0.0
    %2331 = vmatpush1.msra.mxu0 0.0
    %2332 = vmatprep.subr.mxu0 0.0
    %2333 = vmatpush1.msra.mxu0 0.0
    %2334 = vmatprep.subr.mxu0 0.0
    %2335 = vmatpush1.msra.mxu0 0.0
    %2336 = vmatprep.subr.mxu0 0.0
    %2337 = vmatpush1.msra.mxu0 0.0
    %2338 = vmatprep.subr.mxu0 0.0
    %2339 = vmatpush1.msra.mxu0 0.0
    %2340 = vmatprep.subr.mxu0 0.0
    %2341 = vmatpush1.msra.mxu0 0.0
    %2342 = vmatprep.subr.mxu0 0.0
    %2343 = vmatpush1.msra.mxu0 0.0
    %2344 = vmatprep.subr.mxu0 0.0
    %2345 = vmatpush1.msra.mxu0 0.0
    %2346 = vmatprep.subr.mxu0 0.0
    %2347 = vmatpush1.msra.mxu0 0.0
    %2348 = vmatprep.subr.mxu0 0.0
    %2349 = vmatpush1.msra.mxu0 0.0
    %2350 = vmatprep.subr.mxu0 0.0
    %2351 = vmatpush1.msra.mxu0 0.0
    %2352 = vmatprep.subr.mxu0 0.0
    %2353 = vmatpush1.msra.mxu0 0.0
    %2354 = vmatprep.mubr.f32.mxu0 0.0
    %2355 = vmatmul.mubr.f32.gmra.mrb[0].mxu0 %v2267
    %v2356 = vpop.f32.mrb[0].mxu0
    %v2357 = vadd.f32 %v2289, %v2356
    %v2358 = vpop.f32.mrb[0].mxu0
    %2359 = vdwg.mxu0
    %v2360 = vxor.u32 %v2357, 2147483648
    %v2361 = vmul.f32 %v2360, 1.442695
    %v2362 = vpow.pop %v2361
    %v2363 = vadd.f32 %v2362, 1.0
    %v2364 = vrcp.pop %v2363
    %v2365 = vmul.f32 1.0, %v2364
    %2366 = vst [vmem:[#allocation8] sm:$0xff] %v2365
    // Predicated region
    $region26: #{tpu_custom_call.1} parent=1 // pred_check
      _
    $region27: #{tpu_custom_call.1} parent=1 // pred_check_branch
      %2368 = sbr.rel (0) target = $region29
    $region28: #{tpu_custom_call.1} parent=1 // pred_region
      %s2370 = ssub.s32 128, 128
      %2371 = vsyncadd [#allocation4], %s2370
      %s2373 = sshll.u32 [#allocation8], 4
      %s2374 = int_to_ptr.vmem [resolvable:$true] %s2373
      %2376 = dma.vmem_to_hbm [thread:$0]  %s2374, 128, %s3, [#allocation4]
    $region29: #{tpu_custom_call.1} parent=1 // pred_fallthru
      _
    // Predicated region
    $region30: #{tpu_custom_call.1} parent=1 // pred_check
      _
    $region31: #{tpu_custom_call.1} parent=1 // pred_check_branch
      %2378 = sbr.rel (0) target = $region33
    $region32: #{tpu_custom_call.1} parent=1 // pred_region
      %2379 = dma.done [#allocation4], 128
    $region33: #{tpu_custom_call.1} parent=1 // pred_fallthru
      _
    %2380 = vsyncpa [#allocation3], 1
    %2381 = vsyncpa [#allocation6], 1
    %2382 = vsyncpa [#allocation4], 1

</llo_original>
